<compile_context>
chip_gen: v6e
topology: v6e:2x2x1
jax: 0.10.0
libtpu: 0.0.40
codegen_flags: <defaults>
</compile_context>

<pallas_src>
import math
from functools import partial

import jax
import jax.numpy as jnp
from jax.experimental import pallas as pl
from jax.experimental.pallas import tpu as pltpu


# ---------------------------------------------------------------------------
# Kernel
# ---------------------------------------------------------------------------
def _layer_norm(x, gamma, beta, eps=1e-5):
    mean = jnp.mean(x, axis=-1, keepdims=True)
    cent = x - mean
    var = jnp.mean(cent * cent, axis=-1, keepdims=True)
    return cent * jax.lax.rsqrt(var + eps) * gamma + beta


def bert_encoder_kernel(
    # inputs (order matches in_specs / call args)
    valid_ref,     # SMEM (1, B) int32
    x0_ref,        # (R, H) f32  -- embedded inputs for this batch tile
    wqkv_ref,      # (H, 3H) bf16 -- fused Q/K/V projection
    bqkv_ref,      # (1, 3H) f32
    wo_ref,        # (H, H) bf16
    w1_ref,        # (H, F) bf16
    b1_ref,        # (1, F) f32
    w2_ref,        # (F, H) bf16
    vecs_ref,      # (6, H) f32 rows: [bo, ln1_g, ln1_b, b2, ln2_g, ln2_b]
    # output (resident across the layer grid axis — carries X between layers)
    x_ref,         # (R, H) f32
    # scratch
    attn_scr,      # VMEM (R, H) f32
    hcat_scr,      # VMEM (S, H) bf16 -- per-sequence concat of head outputs
    *, batch_tile, seq_len, num_hiddens, num_heads,
):
    BT, S, H, nH = batch_tile, seq_len, num_hiddens, num_heads
    Dh = H // nH

    # ---- layer-0 prologue: load the (wrapper-embedded) activations --------
    @pl.when(pl.program_id(1) == 0)
    def _load_embeddings():
        x_ref[...] = x0_ref[...]

    x = x_ref[...]                                           # (R, H) f32
    xb = x.astype(jnp.bfloat16)

    # ---- fused QKV projection: one wide MXU matmul -------------------------
    qkv = jnp.dot(xb, wqkv_ref[...],
                  preferred_element_type=jnp.float32) + bqkv_ref[...]
    q = qkv[:, 0:H]
    k = qkv[:, H:2 * H]
    v = qkv[:, 2 * H:3 * H]

    scale = 1.0 / math.sqrt(Dh)
    key_pos = jax.lax.broadcasted_iota(jnp.int32, (S, S), 1)
    bt = pl.program_id(0)

    # ---- multi-head self-attention (per sequence in this batch tile) ------
    for b in range(BT):                                      # static, small
        rows = slice(b * S, (b + 1) * S)
        vlen = valid_ref[0, bt * BT + b]                     # SMEM scalar
        mask = key_pos < vlen                                # mask keys only
        qb = q[rows].astype(jnp.bfloat16)
        kb = k[rows].astype(jnp.bfloat16)
        vb = v[rows].astype(jnp.bfloat16)
        for h in range(nH):                                  # static, small
            cols = slice(h * Dh, (h + 1) * Dh)
            scores = jax.lax.dot_general(
                qb[:, cols], kb[:, cols], (((1,), (1,)), ((), ())),
                preferred_element_type=jnp.float32) * scale  # (S, S) f32
            scores = jnp.where(mask, scores, -1e6)
            m = jnp.max(scores, axis=-1, keepdims=True)
            e = jnp.exp(scores - m)
            denom = jnp.sum(e, axis=-1, keepdims=True)
            p = e * pl.reciprocal(denom, approx=True)        # EUP divide
            o_h = jnp.dot(p.astype(jnp.bfloat16), vb[:, cols],
                          preferred_element_type=jnp.float32)   # (S, Dh)
            hcat_scr[:, cols] = o_h.astype(jnp.bfloat16)     # stage head output
        # ONE full-width output projection per sequence
        attn_b = jnp.dot(hcat_scr[...], wo_ref[...],
                         preferred_element_type=jnp.float32)    # (S, H)
        attn_scr[rows, :] = attn_b                           # write rows directly

    attn = attn_scr[...] + vecs_ref[0:1, :]                  # + bo

    # ---- AddNorm 1 (dropout == identity at inference) ----------------------
    y = _layer_norm(x + attn, vecs_ref[1:2, :], vecs_ref[2:3, :])

    # ---- position-wise FFN --------------------------------------------------
    h1 = jnp.maximum(
        jnp.dot(y.astype(jnp.bfloat16), w1_ref[...],
                preferred_element_type=jnp.float32) + b1_ref[...], 0.0)
    ffn = jnp.dot(h1.astype(jnp.bfloat16), w2_ref[...],
                  preferred_element_type=jnp.float32) + vecs_ref[3:4, :]

    # ---- AddNorm 2 ----------------------------------------------------------
    x_ref[...] = _layer_norm(y + ffn, vecs_ref[4:5, :], vecs_ref[5:6, :])


# ---------------------------------------------------------------------------
# Wrapper
# ---------------------------------------------------------------------------
@partial(jax.jit, static_argnames=("num_heads", "batch_tile"))
def bert_encoder_forward(tokens, segments, valid_lens, params, *,
                         num_heads, batch_tile=1):
    B, S = tokens.shape
    tok_emb = params["token_embedding"]          # (V, H)
    seg_emb = params["segment_embedding"]        # (2, H)
    pos_emb = params["pos_embedding"]            # (1, max_len, H)
    V, H = tok_emb.shape
    L = params["wq"].shape[0]
    F = params["w1"].shape[-1]
    BT = batch_tile
    assert B % BT == 0, "batch must be divisible by batch_tile"
    NBT = B // BT
    R = BT * S

    # Embedding in the wrapper: plain XLA gather, no vocab table in VMEM.
    x0 = (tok_emb[tokens] + seg_emb[segments] + pos_emb[:, :S, :]).astype(jnp.float32)
    x0 = x0.reshape(B * S, H)

    valid2d = valid_lens.reshape(1, B).astype(jnp.int32)

    # Fused / packed per-layer weights: bf16 matmul operands, f32 vectors.
    wqkv = jnp.concatenate([params["wq"], params["wk"], params["wv"]],
                           axis=-1).astype(jnp.bfloat16)          # (L, H, 3H)
    bqkv = jnp.concatenate([params["bq"], params["bk"], params["bv"]],
                           axis=-1).astype(jnp.float32)           # (L, 1, 3H)
    wo = params["wo"].astype(jnp.bfloat16)                        # (L, H, H)
    w1 = params["w1"].astype(jnp.bfloat16)                        # (L, H, F)
    b1 = params["b1"].astype(jnp.float32)                         # (L, 1, F)
    w2 = params["w2"].astype(jnp.bfloat16)                        # (L, F, H)
    vecs = jnp.concatenate([params["bo"], params["ln1_g"], params["ln1_b"],
                            params["b2"], params["ln2_g"], params["ln2_b"]],
                           axis=1).astype(jnp.float32)            # (L, 6, H)

    kernel = partial(bert_encoder_kernel, batch_tile=BT, seq_len=S,
                     num_hiddens=H, num_heads=num_heads)

    def per_tile(rdim, cdim):      # blocked over batch tiles, resident over layers
        return pl.BlockSpec((rdim, cdim), lambda b, l: (b, 0))

    def per_layer(*dims):          # leading layer dim selected by the grid index
        n = len(dims)
        return pl.BlockSpec((None,) + dims, lambda b, l, n=n: (l,) + (0,) * n)

    in_specs = [
        pl.BlockSpec(memory_space=pltpu.MemorySpace.SMEM),   # valid_lens (1, B)
        per_tile(R, H),                                      # x0 (aliased to out)
        per_layer(H, 3 * H),                                 # Wqkv (bf16)
        per_layer(1, 3 * H),                                 # bqkv
        per_layer(H, H),                                     # Wo (bf16)
        per_layer(H, F),                                     # W1 (bf16)
        per_layer(1, F),                                     # b1
        per_layer(F, H),                                     # W2 (bf16)
        per_layer(6, H),                                     # packed bo/ln/b2/ln
    ]

    # VMEM budget: double-buffered bf16 layer weights + resident activation +
    # x0 block + scratch, with headroom.
    weight_bytes = 2 * (H * 3 * H + H * H + H * F + F * H) * 2     # bf16, x2 buffers
    vec_bytes = 2 * (3 * H + 6 * H + F) * 4
    act_bytes = (3 * R * H + S * H) * 4
    vmem_limit = int(min(100 << 20,
                         max(16 << 20,
                             2 * (weight_bytes + vec_bytes + act_bytes) + (4 << 20))))

    out = pl.pallas_call(
        kernel,
        out_shape=jax.ShapeDtypeStruct((B * S, H), jnp.float32),
        grid=(NBT, L),
        in_specs=in_specs,
        # Constant layer index -> activation stays VMEM-resident across layers;
        # batch-tile axis picks disjoint row blocks.
        out_specs=pl.BlockSpec((R, H), lambda b, l: (b, 0)),
        scratch_shapes=[pltpu.VMEM((R, H), jnp.float32),
                        pltpu.VMEM((S, H), jnp.bfloat16)],
        input_output_aliases={1: 0},    # x0 buffer is reused for the output
        compiler_params=pltpu.CompilerParams(
            dimension_semantics=("parallel", "arbitrary"),
            vmem_limit_bytes=vmem_limit),
    )(valid2d, x0, wqkv, bqkv, wo, w1, b1, w2, vecs)
    return out.reshape(B, S, H)


# ---------------------------------------------------------------------------
# Pure-JAX reference (same math as the PyTorch module, inference mode, f32)
# ---------------------------------------------------------------------------
def _layer_norm_ref(x, gamma, beta, eps=1e-5):
    mean = jnp.mean(x, axis=-1, keepdims=True)
    var = jnp.mean((x - mean) ** 2, axis=-1, keepdims=True)
    return (x - mean) / jnp.sqrt(var + eps) * gamma + beta


def bert_encoder_ref(tokens, segments, valid_lens, params, *, num_heads):
    tok_emb = params["token_embedding"]
    seg_emb = params["segment_embedding"]
    pos_emb = params["pos_embedding"]
    B, S = tokens.shape
    H = tok_emb.shape[1]
    nH, Dh = num_heads, H // num_heads
    hp = jax.lax.Precision.HIGHEST

    x = tok_emb[tokens] + seg_emb[segments] + pos_emb[:, :S, :]
    L = params["wq"].shape[0]
    for l in range(L):
        q = jnp.dot(x, params["wq"][l], precision=hp) + params["bq"][l]
        k = jnp.dot(x, params["wk"][l], precision=hp) + params["bk"][l]
        v = jnp.dot(x, params["wv"][l], precision=hp) + params["bv"][l]
        heads = lambda t: t.reshape(B, S, nH, Dh).transpose(0, 2, 1, 3)
        qh, kh, vh = heads(q), heads(k), heads(v)
        scores = jnp.einsum("bhqd,bhkd->bhqk", qh, kh, precision=hp) / math.sqrt(Dh)
        mask = jnp.arange(S)[None, None, None, :] < valid_lens[:, None, None, None]
        scores = jnp.where(mask, scores, -1e6)
        p = jax.nn.softmax(scores, axis=-1)
        o = jnp.einsum("bhqk,bhkd->bhqd", p, vh, precision=hp)
        o = o.transpose(0, 2, 1, 3).reshape(B, S, H)
        attn = jnp.dot(o, params["wo"][l], precision=hp) + params["bo"][l]
        y = _layer_norm_ref(x + attn, params["ln1_g"][l], params["ln1_b"][l])
        h1 = jnp.maximum(jnp.dot(y, params["w1"][l], precision=hp) + params["b1"][l], 0.0)
        ffn = jnp.dot(h1, params["w2"][l], precision=hp) + params["b2"][l]
        x = _layer_norm_ref(y + ffn, params["ln2_g"][l], params["ln2_b"][l])
    return x


# ---------------------------------------------------------------------------
# Example / self-check
# ---------------------------------------------------------------------------
if __name__ == "__main__":
    key = jax.random.PRNGKey(0)
    k_tok, k_params = jax.random.split(key, 2)

    vocab_size = 128
    num_hiddens = 32
    seq_len = 8
    batch = 2
    num_heads = 4
    num_layers = 2
    ffn_num_hiddens = 64
    max_len = 64

    tokens = jax.random.randint(k_tok, (batch, seq_len), 0, vocab_size)
    segments = jnp.array([[0, 0, 0, 0, 1, 1, 1, 1],
                          [0, 0, 0, 1, 1, 1, 1, 1]], dtype=jnp.int32)
    valid_lens = jnp.array([8, 6], dtype=jnp.int32)

    k_iter = iter(jax.random.split(k_params, 24))
    nk = lambda: next(k_iter)
    nrm = lambda k, shape, scale=1.0: scale * jax.random.normal(k, shape, jnp.float32)

    L, H, F = num_layers, num_hiddens, ffn_num_hiddens
    params = {
        # embeddings (weights stored as lookup tables, like nn.Embedding)
        "token_embedding": nrm(nk(), (vocab_size, H)),
        "segment_embedding": nrm(nk(), (2, H)),
        "pos_embedding": nrm(nk(), (1, max_len, H)),
        # per-layer weights stacked on a leading layer dim; Linear weights are
        # stored transposed (in_dim, out_dim) so the kernel computes X @ W + b.
        "wq": nrm(nk(), (L, H, H), 0.1), "bq": nrm(nk(), (L, 1, H), 0.05),
        "wk": nrm(nk(), (L, H, H), 0.1), "bk": nrm(nk(), (L, 1, H), 0.05),
        "wv": nrm(nk(), (L, H, H), 0.1), "bv": nrm(nk(), (L, 1, H), 0.05),
        "wo": nrm(nk(), (L, H, H), 0.1), "bo": nrm(nk(), (L, 1, H), 0.05),
        "ln1_g": 1.0 + nrm(nk(), (L, 1, H), 0.05), "ln1_b": nrm(nk(), (L, 1, H), 0.05),
        "w1": nrm(nk(), (L, H, F), 0.1), "b1": nrm(nk(), (L, 1, F), 0.05),
        "w2": nrm(nk(), (L, F, H), 0.1), "b2": nrm(nk(), (L, 1, H), 0.05),
        "ln2_g": 1.0 + nrm(nk(), (L, 1, H), 0.05), "ln2_b": nrm(nk(), (L, 1, H), 0.05),
    }

    out = bert_encoder_forward(tokens, segments, valid_lens, params,
                               num_heads=num_heads, batch_tile=1)
    out = jax.block_until_ready(out)

    ref = bert_encoder_ref(tokens, segments, valid_lens, params,
                           num_heads=num_heads)

    assert out.shape == (batch, seq_len, num_hiddens)
    assert bool(jnp.all(jnp.isfinite(out)))
    # Tolerance accounts for bf16 MXU operands (per perf plan) vs f32-HIGHEST ref.
    max_err = float(jnp.max(jnp.abs(out - ref)))
    assert jnp.allclose(out, ref, atol=8e-2, rtol=8e-2), f"max abs err {max_err}"

    print("KERNEL_OK")
</pallas_src>

<mosaic_0001>
module attributes {stable_mosaic.version = 11 : i64} {
  func.func @bert_encoder_kernel(%arg0: i32, %arg1: i32, %arg2: memref<1x2xi32, #tpu.memory_space<smem>>, %arg3: memref<8x32xf32, #tpu.memory_space<vmem>>, %arg4: memref<1x32x96xbf16, #tpu.memory_space<vmem>>, %arg5: memref<1x1x96xf32, #tpu.memory_space<vmem>>, %arg6: memref<1x32x32xbf16, #tpu.memory_space<vmem>>, %arg7: memref<1x32x64xbf16, #tpu.memory_space<vmem>>, %arg8: memref<1x1x64xf32, #tpu.memory_space<vmem>>, %arg9: memref<1x64x32xbf16, #tpu.memory_space<vmem>>, %arg10: memref<1x6x32xf32, #tpu.memory_space<vmem>>, %arg11: memref<8x32xf32, #tpu.memory_space<vmem>>, %arg12: memref<8x32xf32, #tpu.memory_space<vmem>>, %arg13: memref<8x32xbf16, #tpu.memory_space<vmem>>) attributes {dimension_semantics = [#tpu.dimension_semantics<parallel>, #tpu.dimension_semantics<arbitrary>], iteration_bounds = array<i64: 2, 2>, scalar_prefetch = 0 : i64, scratch_operands = 2 : i64, tpu.core_type = #tpu.core_type<tc>, window_params = [{transform_indices = @transform_0, window_bounds = array<i64: 1, 2>}, {transform_indices = @transform_1, window_bounds = array<i64: 8, 32>}, {transform_indices = @transform_2, window_bounds = array<i64: 1, 32, 96>}, {transform_indices = @transform_3, window_bounds = array<i64: 1, 1, 96>}, {transform_indices = @transform_4, window_bounds = array<i64: 1, 32, 32>}, {transform_indices = @transform_5, window_bounds = array<i64: 1, 32, 64>}, {transform_indices = @transform_6, window_bounds = array<i64: 1, 1, 64>}, {transform_indices = @transform_7, window_bounds = array<i64: 1, 64, 32>}, {transform_indices = @transform_8, window_bounds = array<i64: 1, 6, 32>}, {transform_indices = @transform_9, window_bounds = array<i64: 8, 32>}]} {
    %c0_i32 = arith.constant 0 : i32
    %0 = arith.cmpi eq, %arg1, %c0_i32 : i32
    %1 = arith.extui %0 : i1 to i32
    %c0_i32_0 = arith.constant 0 : i32
    %2 = arith.cmpi ne, %1, %c0_i32_0 : i32
    scf.if %2 {
      %c0_86 = arith.constant 0 : index
      %c0_87 = arith.constant 0 : index
      %192 = vector.load %arg3[%c0_86, %c0_87] : memref<8x32xf32, #tpu.memory_space<vmem>>, vector<8x32xf32>
      %c0_88 = arith.constant 0 : index
      %c0_89 = arith.constant 0 : index
      %193 = vector.load %arg11[%c0_88, %c0_89] : memref<8x32xf32, #tpu.memory_space<vmem>>, vector<8x32xf32>
      tpu.vector_store %arg11[%c0_88, %c0_89], %192 {strides = array<i32>} : memref<8x32xf32, #tpu.memory_space<vmem>>, vector<8x32xf32>,
    } else {
    }
    %c0 = arith.constant 0 : index
    %c0_1 = arith.constant 0 : index
    %3 = vector.load %arg11[%c0, %c0_1] : memref<8x32xf32, #tpu.memory_space<vmem>>, vector<8x32xf32>
    %4 = arith.truncf %3 : vector<8x32xf32> to vector<8x32xbf16>
    %c0_2 = arith.constant 0 : index
    %c0_3 = arith.constant 0 : index
    %c0_4 = arith.constant 0 : index
    %5 = vector.load %arg4[%c0_2, %c0_3, %c0_4] : memref<1x32x96xbf16, #tpu.memory_space<vmem>>, vector<1x32x96xbf16>
    %6 = vector.shape_cast %5 : vector<1x32x96xbf16> to vector<32x96xbf16>
    %cst = arith.constant dense<0.000000e+00> : vector<8x96xf32>
    %7 = tpu.matmul %4, %6, %cst {dimension_numbers = #tpu.dot_dimension_numbers<[1], [0], [0], [1], [0, 0, 1, 1], [], []>} : vector<8x32xbf16>, vector<32x96xbf16>, vector<8x96xf32> -> vector<8x96xf32>
    %c0_5 = arith.constant 0 : index
    %c0_6 = arith.constant 0 : index
    %c0_7 = arith.constant 0 : index
    %8 = vector.load %arg5[%c0_5, %c0_6, %c0_7] : memref<1x1x96xf32, #tpu.memory_space<vmem>>, vector<1x1x96xf32>
    %9 = vector.shape_cast %8 : vector<1x1x96xf32> to vector<1x96xf32>
    %10 = vector.broadcast %9 : vector<1x96xf32> to vector<8x96xf32>
    %11 = arith.addf %7, %10 : vector<8x96xf32>
    %12 = vector.extract_strided_slice %11 {offsets = [0, 0], sizes = [8, 32], strides = [1, 1]} : vector<8x96xf32> to vector<8x32xf32>
    %13 = vector.extract_strided_slice %11 {offsets = [0, 32], sizes = [8, 32], strides = [1, 1]} : vector<8x96xf32> to vector<8x32xf32>
    %14 = vector.extract_strided_slice %11 {offsets = [0, 64], sizes = [8, 32], strides = [1, 1]} : vector<8x96xf32> to vector<8x32xf32>
    %15 = tpu.iota {dimensions = array<i32: 1>} : vector<8x8xi32>
    %c1_i32 = arith.constant 1 : i32
    %16 = arith.muli %arg0, %c1_i32 : i32
    %c0_i32_8 = arith.constant 0 : i32
    %17 = arith.addi %16, %c0_i32_8 : i32
    %c0_9 = arith.constant 0 : index
    %18 = arith.index_cast %17 : i32 to index
    %19 = memref.load %arg2[%c0_9, %18] : memref<1x2xi32, #tpu.memory_space<smem>>
    %20 = vector.broadcast %19 : i32 to vector<8x8xi32>
    %21 = arith.cmpi slt, %15, %20 : vector<8x8xi32>
    %22 = arith.truncf %12 : vector<8x32xf32> to vector<8x32xbf16>
    %23 = arith.truncf %13 : vector<8x32xf32> to vector<8x32xbf16>
    %24 = arith.truncf %14 : vector<8x32xf32> to vector<8x32xbf16>
    %25 = vector.extract_strided_slice %22 {offsets = [0, 0], sizes = [8, 8], strides = [1, 1]} : vector<8x32xbf16> to vector<8x8xbf16>
    %26 = vector.extract_strided_slice %23 {offsets = [0, 0], sizes = [8, 8], strides = [1, 1]} : vector<8x32xbf16> to vector<8x8xbf16>
    %cst_10 = arith.constant dense<0.000000e+00> : vector<8x8xf32>
    %27 = tpu.matmul %25, %26, %cst_10 {dimension_numbers = #tpu.dot_dimension_numbers<[1], [1], [0], [0], [0, 0, 1, 0], [], []>} : vector<8x8xbf16>, vector<8x8xbf16>, vector<8x8xf32> -> vector<8x8xf32>
    %cst_11 = arith.constant 0.353553385 : f32
    %28 = vector.broadcast %cst_11 : f32 to vector<8x8xf32>
    %29 = arith.mulf %27, %28 : vector<8x8xf32>
    %cst_12 = arith.constant -1.000000e+06 : f32
    %30 = vector.broadcast %cst_12 : f32 to vector<8x8xf32>
    %31 = arith.select %21, %29, %30 : vector<8x8xi1>, vector<8x8xf32>
    %cst_13 = arith.constant dense<0xFF800000> : vector<8xf32>
    %32 = vector.multi_reduction <maximumf>, %31, %cst_13 [1] : vector<8x8xf32> to vector<8xf32>
    %33 = vector.shape_cast %32 : vector<8xf32> to vector<8x1xf32>
    %34 = vector.broadcast %33 : vector<8x1xf32> to vector<8x8xf32>
    %35 = arith.subf %31, %34 : vector<8x8xf32>
    %36 = math.exp %35 : vector<8x8xf32>
    %cst_14 = arith.constant dense<0.000000e+00> : vector<8xf32>
    %37 = vector.multi_reduction <add>, %36, %cst_14 [1] : vector<8x8xf32> to vector<8xf32>
    %38 = vector.shape_cast %37 : vector<8xf32> to vector<8x1xf32>
    %39 = tpu.reciprocal %38 {approx = true} : vector<8x1xf32> -> vector<8x1xf32>
    %40 = vector.broadcast %39 : vector<8x1xf32> to vector<8x8xf32>
    %41 = arith.mulf %36, %40 : vector<8x8xf32>
    %42 = arith.truncf %41 : vector<8x8xf32> to vector<8x8xbf16>
    %43 = vector.extract_strided_slice %24 {offsets = [0, 0], sizes = [8, 8], strides = [1, 1]} : vector<8x32xbf16> to vector<8x8xbf16>
    %cst_15 = arith.constant dense<0.000000e+00> : vector<8x8xf32>
    %44 = tpu.matmul %42, %43, %cst_15 {dimension_numbers = #tpu.dot_dimension_numbers<[1], [0], [0], [1], [0, 0, 1, 1], [], []>} : vector<8x8xbf16>, vector<8x8xbf16>, vector<8x8xf32> -> vector<8x8xf32>
    %45 = arith.truncf %44 : vector<8x8xf32> to vector<8x8xbf16>
    %c0_16 = arith.constant 0 : index
    %c0_17 = arith.constant 0 : index
    %46 = vector.load %arg13[%c0_16, %c0_17] : memref<8x32xbf16, #tpu.memory_space<vmem>>, vector<8x8xbf16>
    tpu.vector_store %arg13[%c0_16, %c0_17], %45 {strides = array<i32>} : memref<8x32xbf16, #tpu.memory_space<vmem>>, vector<8x8xbf16>,
    %47 = vector.extract_strided_slice %22 {offsets = [0, 8], sizes = [8, 8], strides = [1, 1]} : vector<8x32xbf16> to vector<8x8xbf16>
    %48 = vector.extract_strided_slice %23 {offsets = [0, 8], sizes = [8, 8], strides = [1, 1]} : vector<8x32xbf16> to vector<8x8xbf16>
    %cst_18 = arith.constant dense<0.000000e+00> : vector<8x8xf32>
    %49 = tpu.matmul %47, %48, %cst_18 {dimension_numbers = #tpu.dot_dimension_numbers<[1], [1], [0], [0], [0, 0, 1, 0], [], []>} : vector<8x8xbf16>, vector<8x8xbf16>, vector<8x8xf32> -> vector<8x8xf32>
    %cst_19 = arith.constant 0.353553385 : f32
    %50 = vector.broadcast %cst_19 : f32 to vector<8x8xf32>
    %51 = arith.mulf %49, %50 : vector<8x8xf32>
    %cst_20 = arith.constant -1.000000e+06 : f32
    %52 = vector.broadcast %cst_20 : f32 to vector<8x8xf32>
    %53 = arith.select %21, %51, %52 : vector<8x8xi1>, vector<8x8xf32>
    %cst_21 = arith.constant dense<0xFF800000> : vector<8xf32>
    %54 = vector.multi_reduction <maximumf>, %53, %cst_21 [1] : vector<8x8xf32> to vector<8xf32>
    %55 = vector.shape_cast %54 : vector<8xf32> to vector<8x1xf32>
    %56 = vector.broadcast %55 : vector<8x1xf32> to vector<8x8xf32>
    %57 = arith.subf %53, %56 : vector<8x8xf32>
    %58 = math.exp %57 : vector<8x8xf32>
    %cst_22 = arith.constant dense<0.000000e+00> : vector<8xf32>
    %59 = vector.multi_reduction <add>, %58, %cst_22 [1] : vector<8x8xf32> to vector<8xf32>
    %60 = vector.shape_cast %59 : vector<8xf32> to vector<8x1xf32>
    %61 = tpu.reciprocal %60 {approx = true} : vector<8x1xf32> -> vector<8x1xf32>
    %62 = vector.broadcast %61 : vector<8x1xf32> to vector<8x8xf32>
    %63 = arith.mulf %58, %62 : vector<8x8xf32>
    %64 = arith.truncf %63 : vector<8x8xf32> to vector<8x8xbf16>
    %65 = vector.extract_strided_slice %24 {offsets = [0, 8], sizes = [8, 8], strides = [1, 1]} : vector<8x32xbf16> to vector<8x8xbf16>
    %cst_23 = arith.constant dense<0.000000e+00> : vector<8x8xf32>
    %66 = tpu.matmul %64, %65, %cst_23 {dimension_numbers = #tpu.dot_dimension_numbers<[1], [0], [0], [1], [0, 0, 1, 1], [], []>} : vector<8x8xbf16>, vector<8x8xbf16>, vector<8x8xf32> -> vector<8x8xf32>
    %67 = arith.truncf %66 : vector<8x8xf32> to vector<8x8xbf16>
    %c0_24 = arith.constant 0 : index
    %c8 = arith.constant 8 : index
    %68 = vector.load %arg13[%c0_24, %c8] : memref<8x32xbf16, #tpu.memory_space<vmem>>, vector<8x8xbf16>
    tpu.vector_store %arg13[%c0_24, %c8], %67 {strides = array<i32>} : memref<8x32xbf16, #tpu.memory_space<vmem>>, vector<8x8xbf16>,
    %69 = vector.extract_strided_slice %22 {offsets = [0, 16], sizes = [8, 8], strides = [1, 1]} : vector<8x32xbf16> to vector<8x8xbf16>
    %70 = vector.extract_strided_slice %23 {offsets = [0, 16], sizes = [8, 8], strides = [1, 1]} : vector<8x32xbf16> to vector<8x8xbf16>
    %cst_25 = arith.constant dense<0.000000e+00> : vector<8x8xf32>
    %71 = tpu.matmul %69, %70, %cst_25 {dimension_numbers = #tpu.dot_dimension_numbers<[1], [1], [0], [0], [0, 0, 1, 0], [], []>} : vector<8x8xbf16>, vector<8x8xbf16>, vector<8x8xf32> -> vector<8x8xf32>
    %cst_26 = arith.constant 0.353553385 : f32
    %72 = vector.broadcast %cst_26 : f32 to vector<8x8xf32>
    %73 = arith.mulf %71, %72 : vector<8x8xf32>
    %cst_27 = arith.constant -1.000000e+06 : f32
    %74 = vector.broadcast %cst_27 : f32 to vector<8x8xf32>
    %75 = arith.select %21, %73, %74 : vector<8x8xi1>, vector<8x8xf32>
    %cst_28 = arith.constant dense<0xFF800000> : vector<8xf32>
    %76 = vector.multi_reduction <maximumf>, %75, %cst_28 [1] : vector<8x8xf32> to vector<8xf32>
    %77 = vector.shape_cast %76 : vector<8xf32> to vector<8x1xf32>
    %78 = vector.broadcast %77 : vector<8x1xf32> to vector<8x8xf32>
    %79 = arith.subf %75, %78 : vector<8x8xf32>
    %80 = math.exp %79 : vector<8x8xf32>
    %cst_29 = arith.constant dense<0.000000e+00> : vector<8xf32>
    %81 = vector.multi_reduction <add>, %80, %cst_29 [1] : vector<8x8xf32> to vector<8xf32>
    %82 = vector.shape_cast %81 : vector<8xf32> to vector<8x1xf32>
    %83 = tpu.reciprocal %82 {approx = true} : vector<8x1xf32> -> vector<8x1xf32>
    %84 = vector.broadcast %83 : vector<8x1xf32> to vector<8x8xf32>
    %85 = arith.mulf %80, %84 : vector<8x8xf32>
    %86 = arith.truncf %85 : vector<8x8xf32> to vector<8x8xbf16>
    %87 = vector.extract_strided_slice %24 {offsets = [0, 16], sizes = [8, 8], strides = [1, 1]} : vector<8x32xbf16> to vector<8x8xbf16>
    %cst_30 = arith.constant dense<0.000000e+00> : vector<8x8xf32>
    %88 = tpu.matmul %86, %87, %cst_30 {dimension_numbers = #tpu.dot_dimension_numbers<[1], [0], [0], [1], [0, 0, 1, 1], [], []>} : vector<8x8xbf16>, vector<8x8xbf16>, vector<8x8xf32> -> vector<8x8xf32>
    %89 = arith.truncf %88 : vector<8x8xf32> to vector<8x8xbf16>
    %c0_31 = arith.constant 0 : index
    %c16 = arith.constant 16 : index
    %90 = vector.load %arg13[%c0_31, %c16] : memref<8x32xbf16, #tpu.memory_space<vmem>>, vector<8x8xbf16>
    tpu.vector_store %arg13[%c0_31, %c16], %89 {strides = array<i32>} : memref<8x32xbf16, #tpu.memory_space<vmem>>, vector<8x8xbf16>,
    %91 = vector.extract_strided_slice %22 {offsets = [0, 24], sizes = [8, 8], strides = [1, 1]} : vector<8x32xbf16> to vector<8x8xbf16>
    %92 = vector.extract_strided_slice %23 {offsets = [0, 24], sizes = [8, 8], strides = [1, 1]} : vector<8x32xbf16> to vector<8x8xbf16>
    %cst_32 = arith.constant dense<0.000000e+00> : vector<8x8xf32>
    %93 = tpu.matmul %91, %92, %cst_32 {dimension_numbers = #tpu.dot_dimension_numbers<[1], [1], [0], [0], [0, 0, 1, 0], [], []>} : vector<8x8xbf16>, vector<8x8xbf16>, vector<8x8xf32> -> vector<8x8xf32>
    %cst_33 = arith.constant 0.353553385 : f32
    %94 = vector.broadcast %cst_33 : f32 to vector<8x8xf32>
    %95 = arith.mulf %93, %94 : vector<8x8xf32>
    %cst_34 = arith.constant -1.000000e+06 : f32
    %96 = vector.broadcast %cst_34 : f32 to vector<8x8xf32>
    %97 = arith.select %21, %95, %96 : vector<8x8xi1>, vector<8x8xf32>
    %cst_35 = arith.constant dense<0xFF800000> : vector<8xf32>
    %98 = vector.multi_reduction <maximumf>, %97, %cst_35 [1] : vector<8x8xf32> to vector<8xf32>
    %99 = vector.shape_cast %98 : vector<8xf32> to vector<8x1xf32>
    %100 = vector.broadcast %99 : vector<8x1xf32> to vector<8x8xf32>
    %101 = arith.subf %97, %100 : vector<8x8xf32>
    %102 = math.exp %101 : vector<8x8xf32>
    %cst_36 = arith.constant dense<0.000000e+00> : vector<8xf32>
    %103 = vector.multi_reduction <add>, %102, %cst_36 [1] : vector<8x8xf32> to vector<8xf32>
    %104 = vector.shape_cast %103 : vector<8xf32> to vector<8x1xf32>
    %105 = tpu.reciprocal %104 {approx = true} : vector<8x1xf32> -> vector<8x1xf32>
    %106 = vector.broadcast %105 : vector<8x1xf32> to vector<8x8xf32>
    %107 = arith.mulf %102, %106 : vector<8x8xf32>
    %108 = arith.truncf %107 : vector<8x8xf32> to vector<8x8xbf16>
    %109 = vector.extract_strided_slice %24 {offsets = [0, 24], sizes = [8, 8], strides = [1, 1]} : vector<8x32xbf16> to vector<8x8xbf16>
    %cst_37 = arith.constant dense<0.000000e+00> : vector<8x8xf32>
    %110 = tpu.matmul %108, %109, %cst_37 {dimension_numbers = #tpu.dot_dimension_numbers<[1], [0], [0], [1], [0, 0, 1, 1], [], []>} : vector<8x8xbf16>, vector<8x8xbf16>, vector<8x8xf32> -> vector<8x8xf32>
    %111 = arith.truncf %110 : vector<8x8xf32> to vector<8x8xbf16>
    %c0_38 = arith.constant 0 : index
    %c24 = arith.constant 24 : index
    %112 = vector.load %arg13[%c0_38, %c24] : memref<8x32xbf16, #tpu.memory_space<vmem>>, vector<8x8xbf16>
    tpu.vector_store %arg13[%c0_38, %c24], %111 {strides = array<i32>} : memref<8x32xbf16, #tpu.memory_space<vmem>>, vector<8x8xbf16>,
    %c0_39 = arith.constant 0 : index
    %c0_40 = arith.constant 0 : index
    %113 = vector.load %arg13[%c0_39, %c0_40] : memref<8x32xbf16, #tpu.memory_space<vmem>>, vector<8x32xbf16>
    %c0_41 = arith.constant 0 : index
    %c0_42 = arith.constant 0 : index
    %c0_43 = arith.constant 0 : index
    %114 = vector.load %arg6[%c0_41, %c0_42, %c0_43] : memref<1x32x32xbf16, #tpu.memory_space<vmem>>, vector<1x32x32xbf16>
    %115 = vector.shape_cast %114 : vector<1x32x32xbf16> to vector<32x32xbf16>
    %cst_44 = arith.constant dense<0.000000e+00> : vector<8x32xf32>
    %116 = tpu.matmul %113, %115, %cst_44 {dimension_numbers = #tpu.dot_dimension_numbers<[1], [0], [0], [1], [0, 0, 1, 1], [], []>} : vector<8x32xbf16>, vector<32x32xbf16>, vector<8x32xf32> -> vector<8x32xf32>
    %c0_45 = arith.constant 0 : index
    %c0_46 = arith.constant 0 : index
    %117 = vector.load %arg12[%c0_45, %c0_46] : memref<8x32xf32, #tpu.memory_space<vmem>>, vector<8x32xf32>
    tpu.vector_store %arg12[%c0_45, %c0_46], %116 {strides = array<i32>} : memref<8x32xf32, #tpu.memory_space<vmem>>, vector<8x32xf32>,
    %c0_47 = arith.constant 0 : index
    %c0_48 = arith.constant 0 : index
    %118 = vector.load %arg12[%c0_47, %c0_48] : memref<8x32xf32, #tpu.memory_space<vmem>>, vector<8x32xf32>
    %c0_49 = arith.constant 0 : index
    %c0_50 = arith.constant 0 : index
    %c0_51 = arith.constant 0 : index
    %119 = vector.load %arg10[%c0_49, %c0_50, %c0_51] : memref<1x6x32xf32, #tpu.memory_space<vmem>>, vector<1x1x32xf32>
    %120 = vector.shape_cast %119 : vector<1x1x32xf32> to vector<1x32xf32>
    %121 = vector.broadcast %120 : vector<1x32xf32> to vector<8x32xf32>
    %122 = arith.addf %118, %121 : vector<8x32xf32>
    %123 = arith.addf %3, %122 : vector<8x32xf32>
    %c0_52 = arith.constant 0 : index
    %c1 = arith.constant 1 : index
    %c0_53 = arith.constant 0 : index
    %124 = vector.load %arg10[%c0_52, %c1, %c0_53] : memref<1x6x32xf32, #tpu.memory_space<vmem>>, vector<1x1x32xf32>
    %125 = vector.shape_cast %124 : vector<1x1x32xf32> to vector<1x32xf32>
    %c0_54 = arith.constant 0 : index
    %c2 = arith.constant 2 : index
    %c0_55 = arith.constant 0 : index
    %126 = vector.load %arg10[%c0_54, %c2, %c0_55] : memref<1x6x32xf32, #tpu.memory_space<vmem>>, vector<1x1x32xf32>
    %127 = vector.shape_cast %126 : vector<1x1x32xf32> to vector<1x32xf32>
    %cst_56 = arith.constant dense<0.000000e+00> : vector<8xf32>
    %128 = vector.multi_reduction <add>, %123, %cst_56 [1] : vector<8x32xf32> to vector<8xf32>
    %129 = vector.shape_cast %128 : vector<8xf32> to vector<8x1xf32>
    %cst_57 = arith.constant 3.200000e+01 : f32
    %130 = vector.broadcast %cst_57 : f32 to vector<8x1xf32>
    %131 = arith.divf %129, %130 : vector<8x1xf32>
    %132 = vector.broadcast %131 : vector<8x1xf32> to vector<8x32xf32>
    %133 = arith.subf %123, %132 : vector<8x32xf32>
    %134 = arith.mulf %133, %133 : vector<8x32xf32>
    %cst_58 = arith.constant dense<0.000000e+00> : vector<8xf32>
    %135 = vector.multi_reduction <add>, %134, %cst_58 [1] : vector<8x32xf32> to vector<8xf32>
    %136 = vector.shape_cast %135 : vector<8xf32> to vector<8x1xf32>
    %cst_59 = arith.constant 3.200000e+01 : f32
    %137 = vector.broadcast %cst_59 : f32 to vector<8x1xf32>
    %138 = arith.divf %136, %137 : vector<8x1xf32>
    %cst_60 = arith.constant 9.99999974E-6 : f32
    %139 = vector.broadcast %cst_60 : f32 to vector<8x1xf32>
    %140 = arith.addf %138, %139 : vector<8x1xf32>
    %141 = math.rsqrt %140 : vector<8x1xf32>
    %142 = vector.broadcast %141 : vector<8x1xf32> to vector<8x32xf32>
    %143 = arith.mulf %133, %142 : vector<8x32xf32>
    %144 = vector.broadcast %125 : vector<1x32xf32> to vector<8x32xf32>
    %145 = arith.mulf %143, %144 : vector<8x32xf32>
    %146 = vector.broadcast %127 : vector<1x32xf32> to vector<8x32xf32>
    %147 = arith.addf %145, %146 : vector<8x32xf32>
    %148 = arith.truncf %147 : vector<8x32xf32> to vector<8x32xbf16>
    %c0_61 = arith.constant 0 : index
    %c0_62 = arith.constant 0 : index
    %c0_63 = arith.constant 0 : index
    %149 = vector.load %arg7[%c0_61, %c0_62, %c0_63] : memref<1x32x64xbf16, #tpu.memory_space<vmem>>, vector<1x32x64xbf16>
    %150 = vector.shape_cast %149 : vector<1x32x64xbf16> to vector<32x64xbf16>
    %cst_64 = arith.constant dense<0.000000e+00> : vector<8x64xf32>
    %151 = tpu.matmul %148, %150, %cst_64 {dimension_numbers = #tpu.dot_dimension_numbers<[1], [0], [0], [1], [0, 0, 1, 1], [], []>} : vector<8x32xbf16>, vector<32x64xbf16>, vector<8x64xf32> -> vector<8x64xf32>
    %c0_65 = arith.constant 0 : index
    %c0_66 = arith.constant 0 : index
    %c0_67 = arith.constant 0 : index
    %152 = vector.load %arg8[%c0_65, %c0_66, %c0_67] : memref<1x1x64xf32, #tpu.memory_space<vmem>>, vector<1x1x64xf32>
    %153 = vector.shape_cast %152 : vector<1x1x64xf32> to vector<1x64xf32>
    %154 = vector.broadcast %153 : vector<1x64xf32> to vector<8x64xf32>
    %155 = arith.addf %151, %154 : vector<8x64xf32>
    %cst_68 = arith.constant 0.000000e+00 : f32
    %156 = vector.broadcast %cst_68 : f32 to vector<8x64xf32>
    %157 = arith.maximumf %155, %156 : vector<8x64xf32>
    %158 = arith.truncf %157 : vector<8x64xf32> to vector<8x64xbf16>
    %c0_69 = arith.constant 0 : index
    %c0_70 = arith.constant 0 : index
    %c0_71 = arith.constant 0 : index
    %159 = vector.load %arg9[%c0_69, %c0_70, %c0_71] : memref<1x64x32xbf16, #tpu.memory_space<vmem>>, vector<1x64x32xbf16>
    %160 = vector.shape_cast %159 : vector<1x64x32xbf16> to vector<64x32xbf16>
    %cst_72 = arith.constant dense<0.000000e+00> : vector<8x32xf32>
    %161 = tpu.matmul %158, %160, %cst_72 {dimension_numbers = #tpu.dot_dimension_numbers<[1], [0], [0], [1], [0, 0, 1, 1], [], []>} : vector<8x64xbf16>, vector<64x32xbf16>, vector<8x32xf32> -> vector<8x32xf32>
    %c0_73 = arith.constant 0 : index
    %c3 = arith.constant 3 : index
    %c0_74 = arith.constant 0 : index
    %162 = vector.load %arg10[%c0_73, %c3, %c0_74] : memref<1x6x32xf32, #tpu.memory_space<vmem>>, vector<1x1x32xf32>
    %163 = vector.shape_cast %162 : vector<1x1x32xf32> to vector<1x32xf32>
    %164 = vector.broadcast %163 : vector<1x32xf32> to vector<8x32xf32>
    %165 = arith.addf %161, %164 : vector<8x32xf32>
    %166 = arith.addf %147, %165 : vector<8x32xf32>
    %c0_75 = arith.constant 0 : index
    %c4 = arith.constant 4 : index
    %c0_76 = arith.constant 0 : index
    %167 = vector.load %arg10[%c0_75, %c4, %c0_76] : memref<1x6x32xf32, #tpu.memory_space<vmem>>, vector<1x1x32xf32>
    %168 = vector.shape_cast %167 : vector<1x1x32xf32> to vector<1x32xf32>
    %c0_77 = arith.constant 0 : index
    %c5 = arith.constant 5 : index
    %c0_78 = arith.constant 0 : index
    %169 = vector.load %arg10[%c0_77, %c5, %c0_78] : memref<1x6x32xf32, #tpu.memory_space<vmem>>, vector<1x1x32xf32>
    %170 = vector.shape_cast %169 : vector<1x1x32xf32> to vector<1x32xf32>
    %cst_79 = arith.constant dense<0.000000e+00> : vector<8xf32>
    %171 = vector.multi_reduction <add>, %166, %cst_79 [1] : vector<8x32xf32> to vector<8xf32>
    %172 = vector.shape_cast %171 : vector<8xf32> to vector<8x1xf32>
    %cst_80 = arith.constant 3.200000e+01 : f32
    %173 = vector.broadcast %cst_80 : f32 to vector<8x1xf32>
    %174 = arith.divf %172, %173 : vector<8x1xf32>
    %175 = vector.broadcast %174 : vector<8x1xf32> to vector<8x32xf32>
    %176 = arith.subf %166, %175 : vector<8x32xf32>
    %177 = arith.mulf %176, %176 : vector<8x32xf32>
    %cst_81 = arith.constant dense<0.000000e+00> : vector<8xf32>
    %178 = vector.multi_reduction <add>, %177, %cst_81 [1] : vector<8x32xf32> to vector<8xf32>
    %179 = vector.shape_cast %178 : vector<8xf32> to vector<8x1xf32>
    %cst_82 = arith.constant 3.200000e+01 : f32
    %180 = vector.broadcast %cst_82 : f32 to vector<8x1xf32>
    %181 = arith.divf %179, %180 : vector<8x1xf32>
    %cst_83 = arith.constant 9.99999974E-6 : f32
    %182 = vector.broadcast %cst_83 : f32 to vector<8x1xf32>
    %183 = arith.addf %181, %182 : vector<8x1xf32>
    %184 = math.rsqrt %183 : vector<8x1xf32>
    %185 = vector.broadcast %184 : vector<8x1xf32> to vector<8x32xf32>
    %186 = arith.mulf %176, %185 : vector<8x32xf32>
    %187 = vector.broadcast %168 : vector<1x32xf32> to vector<8x32xf32>
    %188 = arith.mulf %186, %187 : vector<8x32xf32>
    %189 = vector.broadcast %170 : vector<1x32xf32> to vector<8x32xf32>
    %190 = arith.addf %188, %189 : vector<8x32xf32>
    %c0_84 = arith.constant 0 : index
    %c0_85 = arith.constant 0 : index
    %191 = vector.load %arg11[%c0_84, %c0_85] : memref<8x32xf32, #tpu.memory_space<vmem>>, vector<8x32xf32>
    tpu.vector_store %arg11[%c0_84, %c0_85], %190 {strides = array<i32>} : memref<8x32xf32, #tpu.memory_space<vmem>>, vector<8x32xf32>,
    return
  }
  func.func @transform_0(%arg0: i32, %arg1: i32) -> (i32, i32) {
    %c0_i32 = arith.constant 0 : i32
    %c0_i32_0 = arith.constant 0 : i32
    %c0_i32_1 = arith.constant 0 : i32
    return %c0_i32, %c0_i32_0 : i32, i32
  }
  func.func @transform_1(%arg0: i32, %arg1: i32) -> (i32, i32) {
    %c0_i32 = arith.constant 0 : i32
    %c0_i32_0 = arith.constant 0 : i32
    return %arg0, %c0_i32 : i32, i32
  }
  func.func @transform_2(%arg0: i32, %arg1: i32) -> (i32, i32, i32) {
    %c0_i32 = arith.constant 0 : i32
    %c0_i32_0 = arith.constant 0 : i32
    %c0_i32_1 = arith.constant 0 : i32
    return %arg1, %c0_i32, %c0_i32_0 : i32, i32, i32
  }
  func.func @transform_3(%arg0: i32, %arg1: i32) -> (i32, i32, i32) {
    %c0_i32 = arith.constant 0 : i32
    %c0_i32_0 = arith.constant 0 : i32
    %c0_i32_1 = arith.constant 0 : i32
    return %arg1, %c0_i32, %c0_i32_0 : i32, i32, i32
  }
  func.func @transform_4(%arg0: i32, %arg1: i32) -> (i32, i32, i32) {
    %c0_i32 = arith.constant 0 : i32
    %c0_i32_0 = arith.constant 0 : i32
    %c0_i32_1 = arith.constant 0 : i32
    return %arg1, %c0_i32, %c0_i32_0 : i32, i32, i32
  }
  func.func @transform_5(%arg0: i32, %arg1: i32) -> (i32, i32, i32) {
    %c0_i32 = arith.constant 0 : i32
    %c0_i32_0 = arith.constant 0 : i32
    %c0_i32_1 = arith.constant 0 : i32
    return %arg1, %c0_i32, %c0_i32_0 : i32, i32, i32
  }
  func.func @transform_6(%arg0: i32, %arg1: i32) -> (i32, i32, i32) {
    %c0_i32 = arith.constant 0 : i32
    %c0_i32_0 = arith.constant 0 : i32
    %c0_i32_1 = arith.constant 0 : i32
    return %arg1, %c0_i32, %c0_i32_0 : i32, i32, i32
  }
  func.func @transform_7(%arg0: i32, %arg1: i32) -> (i32, i32, i32) {
    %c0_i32 = arith.constant 0 : i32
    %c0_i32_0 = arith.constant 0 : i32
    %c0_i32_1 = arith.constant 0 : i32
    return %arg1, %c0_i32, %c0_i32_0 : i32, i32, i32
  }
  func.func @transform_8(%arg0: i32, %arg1: i32) -> (i32, i32, i32) {
    %c0_i32 = arith.constant 0 : i32
    %c0_i32_0 = arith.constant 0 : i32
    %c0_i32_1 = arith.constant 0 : i32
    return %arg1, %c0_i32, %c0_i32_0 : i32, i32, i32
  }
  func.func @transform_9(%arg0: i32, %arg1: i32) -> (i32, i32) {
    %c0_i32 = arith.constant 0 : i32
    %c0_i32_0 = arith.constant 0 : i32
    return %arg0, %c0_i32 : i32, i32
  }
}

</mosaic_0001>

<llo_original>
// kernel: bert_encoder_forward.1
$region0: #{bert_encoder_forward.1}
  #allocation0 [shape = 'u32[]', space=smem, size = 0x4, offset = 0x4, fixed_abs, tag = 'smem constant byte address 0x4 - core index']
  #allocation1 [shape = 'u32[144,128]{1,0:T(1,128)}', space=vmem, size = 0x12000, scoped, tag = 'internal scratch']
  #allocation2 [shape = 'f32[8,32]{1,0:T(8,128)}', space=vmem, size = 0x1000, scoped, tag = 'scratch operand']
  #allocation3 [shape = 'bf16[8,32]{1,0:T(8,128)(2,1)}', space=vmem, size = 0x800, scoped, tag = 'scratch operand']
  %s0 = inlined_call_operand.vmem [shape: s32[1,2], index: 0, kind: input, shape index: {}]
  %s1 = inlined_call_operand.vmem [shape: f32[16,32], index: 1, kind: input, shape index: {}, may-alias: {1,9}]
  %s2 = inlined_call_operand.vmem [shape: bf16[2,32,96], index: 2, kind: input, shape index: {}]
  %s3 = inlined_call_operand.vmem [shape: f32[2,1,96], index: 3, kind: input, shape index: {}]
  %s4 = inlined_call_operand.vmem [shape: bf16[2,32,32], index: 4, kind: input, shape index: {}]
  %s5 = inlined_call_operand.vmem [shape: bf16[2,32,64], index: 5, kind: input, shape index: {}]
  %s6 = inlined_call_operand.vmem [shape: f32[2,1,64], index: 6, kind: input, shape index: {}]
  %s7 = inlined_call_operand.vmem [shape: bf16[2,64,32], index: 7, kind: input, shape index: {}]
  %s8 = inlined_call_operand.vmem [shape: f32[2,6,32], index: 8, kind: input, shape index: {}]
  %s9 = inlined_call_operand.vmem [shape: f32[16,32], index: 9, kind: output, shape index: {}, may-alias: {1,9}]
  %s10 = sld [smem:[#allocation0]]
  $region77: #{bert_encoder_forward.1} parent=0
    _
  %s12 = ssub.s32 1, %s10
  %s13 = scalar_select 0, %s12, %s10
  $region1: #{bert_encoder_forward.1} parent=0
    #allocation4 [shape = 'u8[512]{0}', space=smem, size = 0x200, scoped, tag = 'input window, operand 0, single buffered']
    #allocation5 [shape = 's32[2]{0}', space=sflag, size = 0x8, scoped, tag = 'scoped memory for bert_encoder_forward.1']
    %14 = vsyncpa [#allocation5], 0
    loop: start=0, step=1, limit=6
    $region2: #{bert_encoder_forward.1} parent=1 // loop_pre_header
      _
    $region3: #{bert_encoder_forward.1} parent=1 // loop_header
      %s16 = sphi 0, %s20
      %p17 = scmp.ge.s32.totalorder %s16, 6
      %s23 = sphi 0, %s35
      %s24 = sphi 0, %s31
      %s25 = sphi 0, %s23
      %s26 = sphi 0, %s24
      %s27 = sphi 0, %s25
      %s28 = sphi 0, %s26
      %s36 = sphi 0, %s36
      %s38 = sphi 0, %s36
      %s39 = sphi 0, %s38
      %s53 = sphi 0, %s39
      %s59 = sphi 0, %s61
      %s62 = sphi 0, %s59
      %s63 = sphi 0, %s62
      %s79 = sphi 0, %s63
      %s85 = sphi 0, %s87
      %s88 = sphi 0, %s85
      %s89 = sphi 0, %s88
      %s105 = sphi 0, %s89
      %s111 = sphi 0, %s113
      %s114 = sphi 0, %s111
      %s115 = sphi 0, %s114
      %s131 = sphi 0, %s115
      %s137 = sphi 0, %s139
      %s140 = sphi 0, %s137
      %s141 = sphi 0, %s140
      %s157 = sphi 0, %s141
      %s163 = sphi 0, %s165
      %s166 = sphi 0, %s163
      %s167 = sphi 0, %s166
      %s183 = sphi 0, %s167
      %s189 = sphi 0, %s191
      %s192 = sphi 0, %s189
      %s193 = sphi 0, %s192
      %s209 = sphi 0, %s193
      %s215 = sphi 0, %s217
      %s218 = sphi 0, %s215
      %s219 = sphi 0, %s218
      %s235 = sphi 0, %s219
      %s241 = sphi 0, %s243
      %s244 = sphi 0, %s241
      %s245 = sphi 0, %s244
      %s261 = sphi 0, %s245
      %s267 = sphi 0, %s269
      %s270 = sphi 0, %s267
      %s271 = sphi 0, %s270
      %s287 = sphi 0, %s271
    $region4: #{bert_encoder_forward.1} parent=1 // loop_header_branch
      %19 = sbr.rel (%p17) target = $region8
    $region5: #{bert_encoder_forward.1} parent=1 // loop_body
      %s21 = ssub.s32 %s16, 1
      %s22 = ssub.s32 %s16, 2
      %s29 = sadd.s32 1, %s24
      %p30 = scmp.ge.s32.totalorder %s29, 2
      %s31 = scalar_select %p30, 0, %s29
      %s32 = sadd.s32 1, %s23
      %s33 = scalar_select %p30, %s32, %s23
      %p34 = scmp.ge.s32.totalorder %s33, 2
      %s35 = scalar_select %p34, 0, %s33
      %s37 = sadd.s32 %s36, 1
      %p40 = scmp.eq.s32.totalorder %s16, 3
      %p41 = scmp.ne.s32.totalorder %s36, %s38
      %p42 = scmp.eq.s32.totalorder %s16, 0
      %p43 = por %p41, %p42
      %p44 = scmp.ne.s32.totalorder %s36, %s38
      %p45 = scmp.eq.s32.totalorder %s21, 3
      %p46 = por %p44, %p45
      %p47 = scmp.ne.s32.totalorder %s38, %s39
      %p48 = scmp.eq.s32.totalorder %s21, 0
      %p49 = por %p47, %p48
      %p50 = scmp.ne.s32.totalorder %s38, %s39
      %p51 = scmp.eq.s32.totalorder %s22, 3
      %p52 = por %p50, %p51
      %p54 = scmp.ne.s32.totalorder %s39, %s53
      %p55 = scmp.eq.s32.totalorder %s22, 0
      %p56 = por %p54, %p55
      %s57 = ssub.s32 %s23, %s35
      %p58 = scmp.eq.s32.totalorder %s57, 0
      %s60 = sadd.s32 %s59, 1
      %s61 = scalar_select %p58, %s59, %s60
      %p64 = pneg %p58
      %p65 = scmp.eq.s32.totalorder %s16, 3
      %p66 = por %p64, %p65
      %p67 = scmp.ne.s32.totalorder %s59, %s62
      %p68 = scmp.eq.s32.totalorder %s16, 0
      %p69 = por %p67, %p68
      %p70 = scmp.ne.s32.totalorder %s59, %s62
      %p71 = scmp.eq.s32.totalorder %s21, 3
      %p72 = por %p70, %p71
      %p73 = scmp.ne.s32.totalorder %s62, %s63
      %p74 = scmp.eq.s32.totalorder %s21, 0
      %p75 = por %p73, %p74
      %p76 = scmp.ne.s32.totalorder %s62, %s63
      %p77 = scmp.eq.s32.totalorder %s22, 3
      %p78 = por %p76, %p77
      %p80 = scmp.ne.s32.totalorder %s63, %s79
      %p81 = scmp.eq.s32.totalorder %s22, 0
      %p82 = por %p80, %p81
      %s83 = ssub.s32 %s24, %s31
      %p84 = scmp.eq.s32.totalorder %s83, 0
      %s86 = sadd.s32 %s85, 1
      %s87 = scalar_select %p84, %s85, %s86
      %p90 = pneg %p84
      %p91 = scmp.eq.s32.totalorder %s16, 3
      %p92 = por %p90, %p91
      %p93 = scmp.ne.s32.totalorder %s85, %s88
      %p94 = scmp.eq.s32.totalorder %s16, 0
      %p95 = por %p93, %p94
      %p96 = scmp.ne.s32.totalorder %s85, %s88
      %p97 = scmp.eq.s32.totalorder %s21, 3
      %p98 = por %p96, %p97
      %p99 = scmp.ne.s32.totalorder %s88, %s89
      %p100 = scmp.eq.s32.totalorder %s21, 0
      %p101 = por %p99, %p100
      %p102 = scmp.ne.s32.totalorder %s88, %s89
      %p103 = scmp.eq.s32.totalorder %s22, 3
      %p104 = por %p102, %p103
      %p106 = scmp.ne.s32.totalorder %s89, %s105
      %p107 = scmp.eq.s32.totalorder %s22, 0
      %p108 = por %p106, %p107
      %s109 = ssub.s32 %s24, %s31
      %p110 = scmp.eq.s32.totalorder %s109, 0
      %s112 = sadd.s32 %s111, 1
      %s113 = scalar_select %p110, %s111, %s112
      %p116 = pneg %p110
      %p117 = scmp.eq.s32.totalorder %s16, 3
      %p118 = por %p116, %p117
      %p119 = scmp.ne.s32.totalorder %s111, %s114
      %p120 = scmp.eq.s32.totalorder %s16, 0
      %p121 = por %p119, %p120
      %p122 = scmp.ne.s32.totalorder %s111, %s114
      %p123 = scmp.eq.s32.totalorder %s21, 3
      %p124 = por %p122, %p123
      %p125 = scmp.ne.s32.totalorder %s114, %s115
      %p126 = scmp.eq.s32.totalorder %s21, 0
      %p127 = por %p125, %p126
      %p128 = scmp.ne.s32.totalorder %s114, %s115
      %p129 = scmp.eq.s32.totalorder %s22, 3
      %p130 = por %p128, %p129
      %p132 = scmp.ne.s32.totalorder %s115, %s131
      %p133 = scmp.eq.s32.totalorder %s22, 0
      %p134 = por %p132, %p133
      %s135 = ssub.s32 %s24, %s31
      %p136 = scmp.eq.s32.totalorder %s135, 0
      %s138 = sadd.s32 %s137, 1
      %s139 = scalar_select %p136, %s137, %s138
      %p142 = pneg %p136
      %p143 = scmp.eq.s32.totalorder %s16, 3
      %p144 = por %p142, %p143
      %p145 = scmp.ne.s32.totalorder %s137, %s140
      %p146 = scmp.eq.s32.totalorder %s16, 0
      %p147 = por %p145, %p146
      %p148 = scmp.ne.s32.totalorder %s137, %s140
      %p149 = scmp.eq.s32.totalorder %s21, 3
      %p150 = por %p148, %p149
      %p151 = scmp.ne.s32.totalorder %s140, %s141
      %p152 = scmp.eq.s32.totalorder %s21, 0
      %p153 = por %p151, %p152
      %p154 = scmp.ne.s32.totalorder %s140, %s141
      %p155 = scmp.eq.s32.totalorder %s22, 3
      %p156 = por %p154, %p155
      %p158 = scmp.ne.s32.totalorder %s141, %s157
      %p159 = scmp.eq.s32.totalorder %s22, 0
      %p160 = por %p158, %p159
      %s161 = ssub.s32 %s24, %s31
      %p162 = scmp.eq.s32.totalorder %s161, 0
      %s164 = sadd.s32 %s163, 1
      %s165 = scalar_select %p162, %s163, %s164
      %p168 = pneg %p162
      %p169 = scmp.eq.s32.totalorder %s16, 3
      %p170 = por %p168, %p169
      %p171 = scmp.ne.s32.totalorder %s163, %s166
      %p172 = scmp.eq.s32.totalorder %s16, 0
      %p173 = por %p171, %p172
      %p174 = scmp.ne.s32.totalorder %s163, %s166
      %p175 = scmp.eq.s32.totalorder %s21, 3
      %p176 = por %p174, %p175
      %p177 = scmp.ne.s32.totalorder %s166, %s167
      %p178 = scmp.eq.s32.totalorder %s21, 0
      %p179 = por %p177, %p178
      %p180 = scmp.ne.s32.totalorder %s166, %s167
      %p181 = scmp.eq.s32.totalorder %s22, 3
      %p182 = por %p180, %p181
      %p184 = scmp.ne.s32.totalorder %s167, %s183
      %p185 = scmp.eq.s32.totalorder %s22, 0
      %p186 = por %p184, %p185
      %s187 = ssub.s32 %s24, %s31
      %p188 = scmp.eq.s32.totalorder %s187, 0
      %s190 = sadd.s32 %s189, 1
      %s191 = scalar_select %p188, %s189, %s190
      %p194 = pneg %p188
      %p195 = scmp.eq.s32.totalorder %s16, 3
      %p196 = por %p194, %p195
      %p197 = scmp.ne.s32.totalorder %s189, %s192
      %p198 = scmp.eq.s32.totalorder %s16, 0
      %p199 = por %p197, %p198
      %p200 = scmp.ne.s32.totalorder %s189, %s192
      %p201 = scmp.eq.s32.totalorder %s21, 3
      %p202 = por %p200, %p201
      %p203 = scmp.ne.s32.totalorder %s192, %s193
      %p204 = scmp.eq.s32.totalorder %s21, 0
      %p205 = por %p203, %p204
      %p206 = scmp.ne.s32.totalorder %s192, %s193
      %p207 = scmp.eq.s32.totalorder %s22, 3
      %p208 = por %p206, %p207
      %p210 = scmp.ne.s32.totalorder %s193, %s209
      %p211 = scmp.eq.s32.totalorder %s22, 0
      %p212 = por %p210, %p211
      %s213 = ssub.s32 %s24, %s31
      %p214 = scmp.eq.s32.totalorder %s213, 0
      %s216 = sadd.s32 %s215, 1
      %s217 = scalar_select %p214, %s215, %s216
      %p220 = pneg %p214
      %p221 = scmp.eq.s32.totalorder %s16, 3
      %p222 = por %p220, %p221
      %p223 = scmp.ne.s32.totalorder %s215, %s218
      %p224 = scmp.eq.s32.totalorder %s16, 0
      %p225 = por %p223, %p224
      %p226 = scmp.ne.s32.totalorder %s215, %s218
      %p227 = scmp.eq.s32.totalorder %s21, 3
      %p228 = por %p226, %p227
      %p229 = scmp.ne.s32.totalorder %s218, %s219
      %p230 = scmp.eq.s32.totalorder %s21, 0
      %p231 = por %p229, %p230
      %p232 = scmp.ne.s32.totalorder %s218, %s219
      %p233 = scmp.eq.s32.totalorder %s22, 3
      %p234 = por %p232, %p233
      %p236 = scmp.ne.s32.totalorder %s219, %s235
      %p237 = scmp.eq.s32.totalorder %s22, 0
      %p238 = por %p236, %p237
      %s239 = ssub.s32 %s24, %s31
      %p240 = scmp.eq.s32.totalorder %s239, 0
      %s242 = sadd.s32 %s241, 1
      %s243 = scalar_select %p240, %s241, %s242
      %p246 = pneg %p240
      %p247 = scmp.eq.s32.totalorder %s16, 3
      %p248 = por %p246, %p247
      %p249 = scmp.ne.s32.totalorder %s241, %s244
      %p250 = scmp.eq.s32.totalorder %s16, 0
      %p251 = por %p249, %p250
      %p252 = scmp.ne.s32.totalorder %s241, %s244
      %p253 = scmp.eq.s32.totalorder %s21, 3
      %p254 = por %p252, %p253
      %p255 = scmp.ne.s32.totalorder %s244, %s245
      %p256 = scmp.eq.s32.totalorder %s21, 0
      %p257 = por %p255, %p256
      %p258 = scmp.ne.s32.totalorder %s244, %s245
      %p259 = scmp.eq.s32.totalorder %s22, 3
      %p260 = por %p258, %p259
      %p262 = scmp.ne.s32.totalorder %s245, %s261
      %p263 = scmp.eq.s32.totalorder %s22, 0
      %p264 = por %p262, %p263
      %s265 = ssub.s32 %s23, %s35
      %p266 = scmp.eq.s32.totalorder %s265, 0
      %s268 = sadd.s32 %s267, 1
      %s269 = scalar_select %p266, %s267, %s268
      %p272 = pneg %p266
      %p273 = scmp.eq.s32.totalorder %s16, 3
      %p274 = por %p272, %p273
      %p275 = scmp.ne.s32.totalorder %s267, %s270
      %p276 = scmp.eq.s32.totalorder %s16, 0
      %p277 = por %p275, %p276
      %p278 = scmp.ne.s32.totalorder %s267, %s270
      %p279 = scmp.eq.s32.totalorder %s21, 3
      %p280 = por %p278, %p279
      %p281 = scmp.ne.s32.totalorder %s270, %s271
      %p282 = scmp.eq.s32.totalorder %s21, 0
      %p283 = por %p281, %p282
      %p284 = scmp.ne.s32.totalorder %s270, %s271
      %p285 = scmp.eq.s32.totalorder %s22, 3
      %p286 = por %p284, %p285
      %p288 = scmp.ne.s32.totalorder %s271, %s287
      %p289 = scmp.eq.s32.totalorder %s22, 0
      %p290 = por %p288, %p289
      %p291 = scmp.le.s32.totalorder 1, %s16
      %p292 = scmp.lt.s32.totalorder %s16, 5
      %p293 = pnand %p291, %p292
      %p294 = pneg %p293
      // Predicated region
      $region9: #{bert_encoder_forward.1} parent=5 // pred_check
        _
      $region10: #{bert_encoder_forward.1} parent=5 // pred_check_branch
        %296 = sbr.rel (%p293) target = $region12
      $region11: #{bert_encoder_forward.1} parent=5 // pred_region
        %s297 = ssub.s32 %s16, 1
        // Predicated region
        $region13: #{bert_encoder_forward.1} parent=11 // pred_check
          %p298 = pneg %p49
        $region14: #{bert_encoder_forward.1} parent=11 // pred_check_branch
          %300 = sbr.rel (%p298) target = $region16
        $region15: #{bert_encoder_forward.1} parent=11 // pred_region
          %s302 = ssub.s32 16, 16
          %303 = vsyncadd [#allocation5], %s302
          %s305 = sshll.u32 %s0, 4
          %s306 = int_to_ptr.vmem [resolvable:$true] %s305
          %308 = dma.vmem_to_smem %s306, 16, [#allocation4], [#allocation5]
        $region16: #{bert_encoder_forward.1} parent=11 // pred_fallthru
          _
      $region12: #{bert_encoder_forward.1} parent=5 // pred_fallthru
        _
      %p309 = scmp.lt.s32.totalorder %s16, 4
      // Predicated region
      $region17: #{bert_encoder_forward.1} parent=5 // pred_check
        %p310 = pneg %p309
      $region18: #{bert_encoder_forward.1} parent=5 // pred_check_branch
        %312 = sbr.rel (%p310) target = $region20
      $region19: #{bert_encoder_forward.1} parent=5 // pred_region
        // Predicated region
        $region21: #{bert_encoder_forward.1} parent=19 // pred_check
          %p313 = pneg %p69
        $region22: #{bert_encoder_forward.1} parent=19 // pred_check_branch
          %315 = sbr.rel (%p313) target = $region24
        $region23: #{bert_encoder_forward.1} parent=19 // pred_region
          %p316 = scmp.lt.s32.totalorder %s23, 1
          %s317 = scalar_select %p316, %s23, 1
          %s318 = smul.addr %s317, 8
          %s319 = scalar_lea.vmem %s1, %s318
        $region24: #{bert_encoder_forward.1} parent=19 // pred_fallthru
          _
        // Predicated region
        $region25: #{bert_encoder_forward.1} parent=19 // pred_check
          %p320 = pneg %p95
        $region26: #{bert_encoder_forward.1} parent=19 // pred_check_branch
          %322 = sbr.rel (%p320) target = $region28
        $region27: #{bert_encoder_forward.1} parent=19 // pred_region
          %p323 = scmp.lt.s32.totalorder %s24, 1
          %s324 = scalar_select %p323, %s24, 1
          %s325 = smul.addr %s324, 4
          %s326 = smul.addr %s325, 4
          %s327 = scalar_lea.vmem %s2, %s326
        $region28: #{bert_encoder_forward.1} parent=19 // pred_fallthru
          _
        // Predicated region
        $region29: #{bert_encoder_forward.1} parent=19 // pred_check
          %p328 = pneg %p121
        $region30: #{bert_encoder_forward.1} parent=19 // pred_check_branch
          %330 = sbr.rel (%p328) target = $region32
        $region31: #{bert_encoder_forward.1} parent=19 // pred_region
          %p331 = scmp.lt.s32.totalorder %s24, 1
          %s332 = scalar_select %p331, %s24, 1
          %s333 = scalar_lea.vmem %s3, %s332
        $region32: #{bert_encoder_forward.1} parent=19 // pred_fallthru
          _
        // Predicated region
        $region33: #{bert_encoder_forward.1} parent=19 // pred_check
          %p334 = pneg %p147
        $region34: #{bert_encoder_forward.1} parent=19 // pred_check_branch
          %336 = sbr.rel (%p334) target = $region36
        $region35: #{bert_encoder_forward.1} parent=19 // pred_region
          %p337 = scmp.lt.s32.totalorder %s24, 1
          %s338 = scalar_select %p337, %s24, 1
          %s339 = smul.addr %s338, 4
          %s340 = smul.addr %s339, 4
          %s341 = scalar_lea.vmem %s4, %s340
        $region36: #{bert_encoder_forward.1} parent=19 // pred_fallthru
          _
        // Predicated region
        $region37: #{bert_encoder_forward.1} parent=19 // pred_check
          %p342 = pneg %p173
        $region38: #{bert_encoder_forward.1} parent=19 // pred_check_branch
          %344 = sbr.rel (%p342) target = $region40
        $region39: #{bert_encoder_forward.1} parent=19 // pred_region
          %p345 = scmp.lt.s32.totalorder %s24, 1
          %s346 = scalar_select %p345, %s24, 1
          %s347 = smul.addr %s346, 4
          %s348 = smul.addr %s347, 4
          %s349 = scalar_lea.vmem %s5, %s348
        $region40: #{bert_encoder_forward.1} parent=19 // pred_fallthru
          _
        // Predicated region
        $region41: #{bert_encoder_forward.1} parent=19 // pred_check
          %p350 = pneg %p199
        $region42: #{bert_encoder_forward.1} parent=19 // pred_check_branch
          %352 = sbr.rel (%p350) target = $region44
        $region43: #{bert_encoder_forward.1} parent=19 // pred_region
          %p353 = scmp.lt.s32.totalorder %s24, 1
          %s354 = scalar_select %p353, %s24, 1
          %s355 = scalar_lea.vmem %s6, %s354
        $region44: #{bert_encoder_forward.1} parent=19 // pred_fallthru
          _
        // Predicated region
        $region45: #{bert_encoder_forward.1} parent=19 // pred_check
          %p356 = pneg %p225
        $region46: #{bert_encoder_forward.1} parent=19 // pred_check_branch
          %358 = sbr.rel (%p356) target = $region48
        $region47: #{bert_encoder_forward.1} parent=19 // pred_region
          %p359 = scmp.lt.s32.totalorder %s24, 1
          %s360 = scalar_select %p359, %s24, 1
          %s361 = smul.addr %s360, 8
          %s362 = smul.addr %s361, 4
          %s363 = scalar_lea.vmem %s7, %s362
        $region48: #{bert_encoder_forward.1} parent=19 // pred_fallthru
          _
        // Predicated region
        $region49: #{bert_encoder_forward.1} parent=19 // pred_check
          %p364 = pneg %p251
        $region50: #{bert_encoder_forward.1} parent=19 // pred_check_branch
          %366 = sbr.rel (%p364) target = $region52
        $region51: #{bert_encoder_forward.1} parent=19 // pred_region
          %p367 = scmp.lt.s32.totalorder %s24, 1
          %s368 = scalar_select %p367, %s24, 1
          %s369 = smul.addr %s368, 8
          %s370 = scalar_lea.vmem %s8, %s369
        $region52: #{bert_encoder_forward.1} parent=19 // pred_fallthru
          _
      $region20: #{bert_encoder_forward.1} parent=5 // pred_fallthru
        _
      %p371 = scmp.le.s32.totalorder 1, %s16
      %p372 = scmp.lt.s32.totalorder %s16, 5
      %p373 = pnand %p371, %p372
      %p374 = pneg %p373
      // Predicated region
      $region53: #{bert_encoder_forward.1} parent=5 // pred_check
        _
      $region54: #{bert_encoder_forward.1} parent=5 // pred_check_branch
        %376 = sbr.rel (%p373) target = $region56
      $region55: #{bert_encoder_forward.1} parent=5 // pred_region
        %s377 = ssub.s32 %s16, 1
        // Predicated region
        $region57: #{bert_encoder_forward.1} parent=55 // pred_check
          %p378 = pneg %p49
        $region58: #{bert_encoder_forward.1} parent=55 // pred_check_branch
          %380 = sbr.rel (%p378) target = $region60
        $region59: #{bert_encoder_forward.1} parent=55 // pred_region
          %381 = dma.done [#allocation5], 16
        $region60: #{bert_encoder_forward.1} parent=55 // pred_fallthru
          _
        %382 = sfence
        %p383 = pneg %p49
        %p384 = pneg %p46
        %p385 = scmp.lt.s32.totalorder %s25, 1
        %s386 = scalar_select %p385, %s25, 1
        %s387 = smul.addr %s386, 8
        %s388 = scalar_lea.vmem %s1, %s387
        %p389 = pneg %p75
        %p390 = pneg %p72
        %p391 = scmp.lt.s32.totalorder %s26, 1
        %s392 = scalar_select %p391, %s26, 1
        %s393 = smul.addr %s392, 4
        %s394 = smul.addr %s393, 4
        %s395 = scalar_lea.vmem %s2, %s394
        %p396 = pneg %p101
        %p397 = pneg %p98
        %p398 = scmp.lt.s32.totalorder %s26, 1
        %s399 = scalar_select %p398, %s26, 1
        %s400 = scalar_lea.vmem %s3, %s399
        %p401 = pneg %p127
        %p402 = pneg %p124
        %p403 = scmp.lt.s32.totalorder %s26, 1
        %s404 = scalar_select %p403, %s26, 1
        %s405 = smul.addr %s404, 4
        %s406 = smul.addr %s405, 4
        %s407 = scalar_lea.vmem %s4, %s406
        %p408 = pneg %p153
        %p409 = pneg %p150
        %p410 = scmp.lt.s32.totalorder %s26, 1
        %s411 = scalar_select %p410, %s26, 1
        %s412 = smul.addr %s411, 4
        %s413 = smul.addr %s412, 4
        %s414 = scalar_lea.vmem %s5, %s413
        %p415 = pneg %p179
        %p416 = pneg %p176
        %p417 = scmp.lt.s32.totalorder %s26, 1
        %s418 = scalar_select %p417, %s26, 1
        %s419 = scalar_lea.vmem %s6, %s418
        %p420 = pneg %p205
        %p421 = pneg %p202
        %p422 = scmp.lt.s32.totalorder %s26, 1
        %s423 = scalar_select %p422, %s26, 1
        %s424 = smul.addr %s423, 8
        %s425 = smul.addr %s424, 4
        %s426 = scalar_lea.vmem %s7, %s425
        %p427 = pneg %p231
        %p428 = pneg %p228
        %p429 = scmp.lt.s32.totalorder %s26, 1
        %s430 = scalar_select %p429, %s26, 1
        %s431 = smul.addr %s430, 8
        %s432 = scalar_lea.vmem %s8, %s431
        %p433 = pneg %p257
        %p434 = pneg %p254
        %p435 = pneg %p283
        %p436 = pneg %p280
        %p437 = scmp.lt.s32.totalorder %s25, 1
        %s438 = scalar_select %p437, %s25, 1
        %s439 = smul.addr %s438, 8
        %s440 = scalar_lea.vmem %s9, %s439
        %p441 = scmp.lt.s32.totalorder %s25, 1
        %s442 = scalar_select %p441, %s25, 1
        %s443 = smul.addr %s442, 8
        %s444 = scalar_lea.vmem %s1, %s443
        %p445 = scmp.lt.s32.totalorder %s26, 1
        %s446 = scalar_select %p445, %s26, 1
        %s447 = smul.addr %s446, 4
        %s448 = smul.addr %s447, 4
        %s449 = scalar_lea.vmem %s2, %s448
        %p450 = scmp.lt.s32.totalorder %s26, 1
        %s451 = scalar_select %p450, %s26, 1
        %s452 = scalar_lea.vmem %s3, %s451
        %p453 = scmp.lt.s32.totalorder %s26, 1
        %s454 = scalar_select %p453, %s26, 1
        %s455 = smul.addr %s454, 4
        %s456 = smul.addr %s455, 4
        %s457 = scalar_lea.vmem %s4, %s456
        %p458 = scmp.lt.s32.totalorder %s26, 1
        %s459 = scalar_select %p458, %s26, 1
        %s460 = smul.addr %s459, 4
        %s461 = smul.addr %s460, 4
        %s462 = scalar_lea.vmem %s5, %s461
        %p463 = scmp.lt.s32.totalorder %s26, 1
        %s464 = scalar_select %p463, %s26, 1
        %s465 = scalar_lea.vmem %s6, %s464
        %p466 = scmp.lt.s32.totalorder %s26, 1
        %s467 = scalar_select %p466, %s26, 1
        %s468 = smul.addr %s467, 8
        %s469 = smul.addr %s468, 4
        %s470 = scalar_lea.vmem %s7, %s469
        %p471 = scmp.lt.s32.totalorder %s26, 1
        %s472 = scalar_select %p471, %s26, 1
        %s473 = smul.addr %s472, 8
        %s474 = scalar_lea.vmem %s8, %s473
        %p475 = scmp.lt.s32.totalorder %s25, 1
        %s476 = scalar_select %p475, %s25, 1
        %s477 = smul.addr %s476, 8
        %s478 = scalar_lea.vmem %s9, %s477
        %p480 = scmp.eq.s32.totalorder %s26, 0
        // Predicated region
        $region61: #{bert_encoder_forward.1} parent=55 // pred_check
          %p481 = pneg %p480
        $region62: #{bert_encoder_forward.1} parent=55 // pred_check_branch
          %483 = sbr.rel (%p481) target = $region64
        $region63: #{bert_encoder_forward.1} parent=55 // pred_region
          %v484 = vld [vmem:[%s444] sm:$0xff]
          %vm485 = vcmask 261120
          %486 = vst.msk [vmem:[%s478] sm:$0xff] %vm485, %v484
        $region64: #{bert_encoder_forward.1} parent=55 // pred_fallthru
          _
        %v487 = vld [vmem:[%s478] sm:$0xff]
        %v488 = vpack.c.bf16 %v487, %v487
        %v489 = vld [vmem:[%s449] sm:$0xf]
        %v490 = vld [vmem:[%s449 + $0x4] sm:$0xf]
        %v491 = vld [vmem:[%s449 + $0x8] sm:$0xf]
        %v492 = vld [vmem:[%s449 + $0xc] sm:$0xf]
        %v493 = vld [vmem:[%s452] sm:$0x1]
        %v495 = vlaneseq
        %v496 = vshrl.u32 %v495, 7
        %v497 = vsub.s32 0, %v496
        %v498 = vrot.slane %v493, %v497
        %v504 = vunpack.c.l.b16 %v489
        %v505 = vunpack.c.l.b16 %v490
        %v506 = vunpack.c.l.b16 %v491
        %v507 = vunpack.c.l.b16 %v492
        %v508 = vpack.c.b16 %v505, %v504
        %v509 = vpack.c.b16 %v507, %v506
        %vm512 = vcmask 261120
        %v514 = vsel %vm512, %v488, 0
        %516 = vmatprep.subr.bf16.mxu0 0
        %517 = vmatpush1.bf16.msra.mxu0 0
        %518 = vmatprep.subr.bf16.mxu0 0
        %519 = vmatpush1.bf16.msra.mxu0 0
        %520 = vmatprep.subr.bf16.mxu0 0
        %521 = vmatpush1.bf16.msra.mxu0 0
        %522 = vmatprep.subr.bf16.mxu0 0
        %523 = vmatpush1.bf16.msra.mxu0 0
        %524 = vmatprep.subr.bf16.mxu0 0
        %525 = vmatpush1.bf16.msra.mxu0 0
        %526 = vmatprep.subr.bf16.mxu0 0
        %527 = vmatpush1.bf16.msra.mxu0 0
        %528 = vmatprep.subr.bf16.mxu0 0
        %529 = vmatpush1.bf16.msra.mxu0 %v509
        %530 = vmatprep.subr.bf16.mxu0 0
        %531 = vmatpush1.bf16.msra.mxu0 %v508
        %532 = vmatprep.subr.bf16.mxu0 0
        %533 = vmatpush2.bf16.msra.mxu0 0
        %534 = vmatprep.subr.bf16.mxu0 0
        %535 = vmatpush2.bf16.msra.mxu0 0
        %536 = vmatprep.subr.bf16.mxu0 0
        %537 = vmatpush2.bf16.msra.mxu0 0
        %538 = vmatprep.subr.bf16.mxu0 0
        %539 = vmatpush2.bf16.msra.mxu0 0
        %540 = vmatprep.subr.bf16.mxu0 0
        %541 = vmatpush2.bf16.msra.mxu0 0
        %542 = vmatprep.subr.bf16.mxu0 0
        %543 = vmatpush2.bf16.msra.mxu0 0
        %544 = vmatprep.subr.bf16.mxu0 0
        %545 = vmatpush2.bf16.msra.mxu0 0
        %546 = vmatprep.subr.bf16.mxu0 0
        %547 = vmatpush2.bf16.msra.mxu0 0
        %548 = vmatprep.mubr.bf16.mxu0 0
        %549 = vmatmul.mubr.bf16.gmra.mxu0 %v514
        %v550 = vpop.f32.mrf.mxu0
        %v551 = vadd.f32 %v498, %v550
        %v552 = vpop.f32.mrf.mxu0
        %v553 = vpop.f32.mrf.mxu0
        %v554 = vpop.f32.mrf.mxu0
        %555 = vdwg.mxu0
        %v556 = vlaneseq
        %v557 = vand.u32 %v556, 127
        %s558 = sld [smem:[#allocation4 + %s25]]
        %v559 = vstv %s558
        %vm560 = vcmp.lt.s32.totalorder %v557, %v559
        %v561 = vpack.c.bf16 %v551, %v551
        %563 = vrot.lane.b32.xlu0 %v561, 96
        %v564 = vpop.permute.xlu0 %563
        %vm565 = vcmask 64512
        %v567 = vsel %vm565, %v561, 0
        %v570 = vsel %vm565, %v564, 0
        %572 = vmatprep.subr.bf16.mxu0 0
        %573 = vmatpush1.bf16.xpose.msra.mxu0 0
        %574 = vmatprep.subr.bf16.mxu0 0
        %575 = vmatpush1.bf16.xpose.msra.mxu0 0
        %576 = vmatprep.subr.bf16.mxu0 0
        %577 = vmatpush1.bf16.xpose.msra.mxu0 0
        %578 = vmatprep.subr.bf16.mxu0 0
        %579 = vmatpush1.bf16.xpose.msra.mxu0 0
        %580 = vmatprep.subr.bf16.mxu0 0
        %581 = vmatpush1.bf16.xpose.msra.mxu0 0
        %582 = vmatprep.subr.bf16.mxu0 0
        %583 = vmatpush1.bf16.xpose.msra.mxu0 0
        %584 = vmatprep.subr.bf16.mxu0 0
        %585 = vmatpush1.bf16.xpose.msra.mxu0 0
        %586 = vmatprep.subr.bf16.mxu0 0
        %587 = vmatpush1.bf16.xpose.msra.mxu0 %v570
        %588 = vmatprep.subr.bf16.mxu0 0
        %589 = vmatpush2.bf16.xpose.msra.mxu0 0
        %590 = vmatprep.subr.bf16.mxu0 0
        %591 = vmatpush2.bf16.xpose.msra.mxu0 0
        %592 = vmatprep.subr.bf16.mxu0 0
        %593 = vmatpush2.bf16.xpose.msra.mxu0 0
        %594 = vmatprep.subr.bf16.mxu0 0
        %595 = vmatpush2.bf16.xpose.msra.mxu0 0
        %596 = vmatprep.subr.bf16.mxu0 0
        %597 = vmatpush2.bf16.xpose.msra.mxu0 0
        %598 = vmatprep.subr.bf16.mxu0 0
        %599 = vmatpush2.bf16.xpose.msra.mxu0 0
        %600 = vmatprep.subr.bf16.mxu0 0
        %601 = vmatpush2.bf16.xpose.msra.mxu0 0
        %602 = vmatprep.subr.bf16.mxu0 0
        %603 = vmatpush2.bf16.xpose.msra.mxu0 0
        %604 = vmatprep.mubr.bf16.mxu0 0
        %605 = vmatmul.mubr.bf16.gmra.mxu0 %v567
        %v606 = vpop.f32.mrf.mxu0
        %v607 = vadd.f32 0.0, %v606
        %v608 = vpop.f32.mrf.mxu0
        %v609 = vpop.f32.mrf.mxu0
        %v610 = vpop.f32.mrf.mxu0
        %611 = vdwg.mxu0
        %v612 = vmul.f32 %v607, 0.35355338
        %v613 = vsel %vm560, %v612, -1000000.0
        %v614 = vsel %vm565, %v613, -inf
        %615 = vmax.xlane.f32.xlu0 %v614
        %v616 = vpop.xlane.xlu0 %615
        %v617 = vsub.f32 %v613, %v616
        %v618 = vmul.f32 %v617, 1.442695
        %v619 = vpow.pop %v618
        %v620 = vsel %vm565, %v619, 0.0
        %621 = vadd.xlane.f32.xlu0 %v620
        %v622 = vpop.xlane.xlu0 %621
        %v623 = vrcp.pop %v622
        %v624 = vmul.f32 %v619, %v623
        %v625 = vpack.c.bf16 %v624, %v624
        %626 = vrot.lane.b32.xlu0 %v561, 64
        %v627 = vpop.permute.xlu0 %626
        %v629 = vsel %vm565, %v625, 0
        %vm631 = vcmask 1043456
        %v633 = vsel %vm631, %v627, 0
        %635 = vmatprep.subr.bf16.mxu0 0
        %636 = vmatpush1.bf16.msra.mxu0 0
        %637 = vmatprep.subr.bf16.mxu0 0
        %638 = vmatpush1.bf16.msra.mxu0 0
        %639 = vmatprep.subr.bf16.mxu0 0
        %640 = vmatpush1.bf16.msra.mxu0 0
        %641 = vmatprep.subr.bf16.mxu0 0
        %642 = vmatpush1.bf16.msra.mxu0 0
        %643 = vmatprep.subr.bf16.mxu0 0
        %644 = vmatpush1.bf16.msra.mxu0 0
        %645 = vmatprep.subr.bf16.mxu0 0
        %646 = vmatpush1.bf16.msra.mxu0 0
        %647 = vmatprep.subr.bf16.mxu0 0
        %648 = vmatpush1.bf16.msra.mxu0 0
        %649 = vmatprep.subr.bf16.mxu0 0
        %650 = vmatpush1.bf16.msra.mxu0 %v633
        %651 = vmatprep.subr.bf16.mxu0 0
        %652 = vmatpush2.bf16.msra.mxu0 0
        %653 = vmatprep.subr.bf16.mxu0 0
        %654 = vmatpush2.bf16.msra.mxu0 0
        %655 = vmatprep.subr.bf16.mxu0 0
        %656 = vmatpush2.bf16.msra.mxu0 0
        %657 = vmatprep.subr.bf16.mxu0 0
        %658 = vmatpush2.bf16.msra.mxu0 0
        %659 = vmatprep.subr.bf16.mxu0 0
        %660 = vmatpush2.bf16.msra.mxu0 0
        %661 = vmatprep.subr.bf16.mxu0 0
        %662 = vmatpush2.bf16.msra.mxu0 0
        %663 = vmatprep.subr.bf16.mxu0 0
        %664 = vmatpush2.bf16.msra.mxu0 0
        %665 = vmatprep.subr.bf16.mxu0 0
        %666 = vmatpush2.bf16.msra.mxu0 0
        %667 = vmatprep.mubr.bf16.mxu0 0
        %668 = vmatmul.mubr.bf16.gmra.mxu0 %v629
        %v669 = vpop.f32.mrf.mxu0
        %v670 = vadd.f32 0.0, %v669
        %v671 = vpop.f32.mrf.mxu0
        %v672 = vpop.f32.mrf.mxu0
        %v673 = vpop.f32.mrf.mxu0
        %674 = vdwg.mxu0
        %v675 = vpack.c.bf16 %v670, %v670
        %vm676 = vcmask 60416
        %677 = vst.msk [vmem:[#allocation3] sm:$0xf] %vm676, %v675
        %678 = vrot.lane.b32.xlu0 %v561, 120
        %v679 = vpop.permute.xlu0 %678
        %680 = vrot.lane.b32.xlu0 %v561, 88
        %v681 = vpop.permute.xlu0 %680
        %v683 = vsel %vm565, %v679, 0
        %v686 = vsel %vm565, %v681, 0
        %688 = vmatprep.subr.bf16.mxu0 0
        %689 = vmatpush1.bf16.xpose.msra.mxu0 0
        %690 = vmatprep.subr.bf16.mxu0 0
        %691 = vmatpush1.bf16.xpose.msra.mxu0 0
        %692 = vmatprep.subr.bf16.mxu0 0
        %693 = vmatpush1.bf16.xpose.msra.mxu0 0
        %694 = vmatprep.subr.bf16.mxu0 0
        %695 = vmatpush1.bf16.xpose.msra.mxu0 0
        %696 = vmatprep.subr.bf16.mxu0 0
        %697 = vmatpush1.bf16.xpose.msra.mxu0 0
        %698 = vmatprep.subr.bf16.mxu0 0
        %699 = vmatpush1.bf16.xpose.msra.mxu0 0
        %700 = vmatprep.subr.bf16.mxu0 0
        %701 = vmatpush1.bf16.xpose.msra.mxu0 0
        %702 = vmatprep.subr.bf16.mxu0 0
        %703 = vmatpush1.bf16.xpose.msra.mxu0 %v686
        %704 = vmatprep.subr.bf16.mxu0 0
        %705 = vmatpush2.bf16.xpose.msra.mxu0 0
        %706 = vmatprep.subr.bf16.mxu0 0
        %707 = vmatpush2.bf16.xpose.msra.mxu0 0
        %708 = vmatprep.subr.bf16.mxu0 0
        %709 = vmatpush2.bf16.xpose.msra.mxu0 0
        %710 = vmatprep.subr.bf16.mxu0 0
        %711 = vmatpush2.bf16.xpose.msra.mxu0 0
        %712 = vmatprep.subr.bf16.mxu0 0
        %713 = vmatpush2.bf16.xpose.msra.mxu0 0
        %714 = vmatprep.subr.bf16.mxu0 0
        %715 = vmatpush2.bf16.xpose.msra.mxu0 0
        %716 = vmatprep.subr.bf16.mxu0 0
        %717 = vmatpush2.bf16.xpose.msra.mxu0 0
        %718 = vmatprep.subr.bf16.mxu0 0
        %719 = vmatpush2.bf16.xpose.msra.mxu0 0
        %720 = vmatprep.mubr.bf16.mxu0 0
        %721 = vmatmul.mubr.bf16.gmra.mxu0 %v683
        %v722 = vpop.f32.mrf.mxu0
        %v723 = vadd.f32 0.0, %v722
        %v724 = vpop.f32.mrf.mxu0
        %v725 = vpop.f32.mrf.mxu0
        %v726 = vpop.f32.mrf.mxu0
        %727 = vdwg.mxu0
        %v728 = vmul.f32 %v723, 0.35355338
        %v729 = vsel %vm560, %v728, -1000000.0
        %v730 = vsel %vm565, %v729, -inf
        %731 = vmax.xlane.f32.xlu0 %v730
        %v732 = vpop.xlane.xlu0 %731
        %v733 = vsub.f32 %v729, %v732
        %v734 = vmul.f32 %v733, 1.442695
        %v735 = vpow.pop %v734
        %v736 = vsel %vm565, %v735, 0.0
        %737 = vadd.xlane.f32.xlu0 %v736
        %v738 = vpop.xlane.xlu0 %737
        %v739 = vrcp.pop %v738
        %v740 = vmul.f32 %v735, %v739
        %v741 = vpack.c.bf16 %v740, %v740
        %742 = vrot.lane.b32.xlu0 %v561, 56
        %v743 = vpop.permute.xlu0 %742
        %v745 = vsel %vm565, %v741, 0
        %v748 = vsel %vm631, %v743, 0
        %750 = vmatprep.subr.bf16.mxu0 0
        %751 = vmatpush1.bf16.msra.mxu0 0
        %752 = vmatprep.subr.bf16.mxu0 0
        %753 = vmatpush1.bf16.msra.mxu0 0
        %754 = vmatprep.subr.bf16.mxu0 0
        %755 = vmatpush1.bf16.msra.mxu0 0
        %756 = vmatprep.subr.bf16.mxu0 0
        %757 = vmatpush1.bf16.msra.mxu0 0
        %758 = vmatprep.subr.bf16.mxu0 0
        %759 = vmatpush1.bf16.msra.mxu0 0
        %760 = vmatprep.subr.bf16.mxu0 0
        %761 = vmatpush1.bf16.msra.mxu0 0
        %762 = vmatprep.subr.bf16.mxu0 0
        %763 = vmatpush1.bf16.msra.mxu0 0
        %764 = vmatprep.subr.bf16.mxu0 0
        %765 = vmatpush1.bf16.msra.mxu0 %v748
        %766 = vmatprep.subr.bf16.mxu0 0
        %767 = vmatpush2.bf16.msra.mxu0 0
        %768 = vmatprep.subr.bf16.mxu0 0
        %769 = vmatpush2.bf16.msra.mxu0 0
        %770 = vmatprep.subr.bf16.mxu0 0
        %771 = vmatpush2.bf16.msra.mxu0 0
        %772 = vmatprep.subr.bf16.mxu0 0
        %773 = vmatpush2.bf16.msra.mxu0 0
        %774 = vmatprep.subr.bf16.mxu0 0
        %775 = vmatpush2.bf16.msra.mxu0 0
        %776 = vmatprep.subr.bf16.mxu0 0
        %777 = vmatpush2.bf16.msra.mxu0 0
        %778 = vmatprep.subr.bf16.mxu0 0
        %779 = vmatpush2.bf16.msra.mxu0 0
        %780 = vmatprep.subr.bf16.mxu0 0
        %781 = vmatpush2.bf16.msra.mxu0 0
        %782 = vmatprep.mubr.bf16.mxu0 0
        %783 = vmatmul.mubr.bf16.gmra.mxu0 %v745
        %v784 = vpop.f32.mrf.mxu0
        %v785 = vadd.f32 0.0, %v784
        %v786 = vpop.f32.mrf.mxu0
        %v787 = vpop.f32.mrf.mxu0
        %v788 = vpop.f32.mrf.mxu0
        %789 = vdwg.mxu0
        %v790 = vpack.c.bf16 %v785, %v785
        %v792 = vunpack.c.l.b16 %v790
        %v793 = vpack.c.b16 %v792, %v792
        %794 = vrot.lane.b32.xlu0 %v793, 8
        %v795 = vpop.permute.xlu0 %794
        %vm797 = vcmask 126016
        %798 = vst.msk [vmem:[#allocation3] sm:$0xf] %vm797, %v795
        %799 = vrot.lane.b32.xlu0 %v561, 112
        %v800 = vpop.permute.xlu0 %799
        %801 = vrot.lane.b32.xlu0 %v561, 80
        %v802 = vpop.permute.xlu0 %801
        %v804 = vsel %vm565, %v800, 0
        %v807 = vsel %vm565, %v802, 0
        %809 = vmatprep.subr.bf16.mxu0 0
        %810 = vmatpush1.bf16.xpose.msra.mxu0 0
        %811 = vmatprep.subr.bf16.mxu0 0
        %812 = vmatpush1.bf16.xpose.msra.mxu0 0
        %813 = vmatprep.subr.bf16.mxu0 0
        %814 = vmatpush1.bf16.xpose.msra.mxu0 0
        %815 = vmatprep.subr.bf16.mxu0 0
        %816 = vmatpush1.bf16.xpose.msra.mxu0 0
        %817 = vmatprep.subr.bf16.mxu0 0
        %818 = vmatpush1.bf16.xpose.msra.mxu0 0
        %819 = vmatprep.subr.bf16.mxu0 0
        %820 = vmatpush1.bf16.xpose.msra.mxu0 0
        %821 = vmatprep.subr.bf16.mxu0 0
        %822 = vmatpush1.bf16.xpose.msra.mxu0 0
        %823 = vmatprep.subr.bf16.mxu0 0
        %824 = vmatpush1.bf16.xpose.msra.mxu0 %v807
        %825 = vmatprep.subr.bf16.mxu0 0
        %826 = vmatpush2.bf16.xpose.msra.mxu0 0
        %827 = vmatprep.subr.bf16.mxu0 0
        %828 = vmatpush2.bf16.xpose.msra.mxu0 0
        %829 = vmatprep.subr.bf16.mxu0 0
        %830 = vmatpush2.bf16.xpose.msra.mxu0 0
        %831 = vmatprep.subr.bf16.mxu0 0
        %832 = vmatpush2.bf16.xpose.msra.mxu0 0
        %833 = vmatprep.subr.bf16.mxu0 0
        %834 = vmatpush2.bf16.xpose.msra.mxu0 0
        %835 = vmatprep.subr.bf16.mxu0 0
        %836 = vmatpush2.bf16.xpose.msra.mxu0 0
        %837 = vmatprep.subr.bf16.mxu0 0
        %838 = vmatpush2.bf16.xpose.msra.mxu0 0
        %839 = vmatprep.subr.bf16.mxu0 0
        %840 = vmatpush2.bf16.xpose.msra.mxu0 0
        %841 = vmatprep.mubr.bf16.mxu0 0
        %842 = vmatmul.mubr.bf16.gmra.mxu0 %v804
        %v843 = vpop.f32.mrf.mxu0
        %v844 = vadd.f32 0.0, %v843
        %v845 = vpop.f32.mrf.mxu0
        %v846 = vpop.f32.mrf.mxu0
        %v847 = vpop.f32.mrf.mxu0
        %848 = vdwg.mxu0
        %v849 = vmul.f32 %v844, 0.35355338
        %v850 = vsel %vm560, %v849, -1000000.0
        %v851 = vsel %vm565, %v850, -inf
        %852 = vmax.xlane.f32.xlu0 %v851
        %v853 = vpop.xlane.xlu0 %852
        %v854 = vsub.f32 %v850, %v853
        %v855 = vmul.f32 %v854, 1.442695
        %v856 = vpow.pop %v855
        %v857 = vsel %vm565, %v856, 0.0
        %858 = vadd.xlane.f32.xlu0 %v857
        %v859 = vpop.xlane.xlu0 %858
        %v860 = vrcp.pop %v859
        %v861 = vmul.f32 %v856, %v860
        %v862 = vpack.c.bf16 %v861, %v861
        %863 = vrot.lane.b32.xlu0 %v561, 48
        %v864 = vpop.permute.xlu0 %863
        %v866 = vsel %vm565, %v862, 0
        %v869 = vsel %vm631, %v864, 0
        %871 = vmatprep.subr.bf16.mxu0 0
        %872 = vmatpush1.bf16.msra.mxu0 0
        %873 = vmatprep.subr.bf16.mxu0 0
        %874 = vmatpush1.bf16.msra.mxu0 0
        %875 = vmatprep.subr.bf16.mxu0 0
        %876 = vmatpush1.bf16.msra.mxu0 0
        %877 = vmatprep.subr.bf16.mxu0 0
        %878 = vmatpush1.bf16.msra.mxu0 0
        %879 = vmatprep.subr.bf16.mxu0 0
        %880 = vmatpush1.bf16.msra.mxu0 0
        %881 = vmatprep.subr.bf16.mxu0 0
        %882 = vmatpush1.bf16.msra.mxu0 0
        %883 = vmatprep.subr.bf16.mxu0 0
        %884 = vmatpush1.bf16.msra.mxu0 0
        %885 = vmatprep.subr.bf16.mxu0 0
        %886 = vmatpush1.bf16.msra.mxu0 %v869
        %887 = vmatprep.subr.bf16.mxu0 0
        %888 = vmatpush2.bf16.msra.mxu0 0
        %889 = vmatprep.subr.bf16.mxu0 0
        %890 = vmatpush2.bf16.msra.mxu0 0
        %891 = vmatprep.subr.bf16.mxu0 0
        %892 = vmatpush2.bf16.msra.mxu0 0
        %893 = vmatprep.subr.bf16.mxu0 0
        %894 = vmatpush2.bf16.msra.mxu0 0
        %895 = vmatprep.subr.bf16.mxu0 0
        %896 = vmatpush2.bf16.msra.mxu0 0
        %897 = vmatprep.subr.bf16.mxu0 0
        %898 = vmatpush2.bf16.msra.mxu0 0
        %899 = vmatprep.subr.bf16.mxu0 0
        %900 = vmatpush2.bf16.msra.mxu0 0
        %901 = vmatprep.subr.bf16.mxu0 0
        %902 = vmatpush2.bf16.msra.mxu0 0
        %903 = vmatprep.mubr.bf16.mxu0 0
        %904 = vmatmul.mubr.bf16.gmra.mxu0 %v866
        %v905 = vpop.f32.mrf.mxu0
        %v906 = vadd.f32 0.0, %v905
        %v907 = vpop.f32.mrf.mxu0
        %v908 = vpop.f32.mrf.mxu0
        %v909 = vpop.f32.mrf.mxu0
        %910 = vdwg.mxu0
        %v911 = vpack.c.bf16 %v906, %v906
        %v913 = vunpack.c.l.b16 %v911
        %v914 = vpack.c.b16 %v913, %v913
        %915 = vrot.lane.b32.xlu0 %v914, 16
        %v916 = vpop.permute.xlu0 %915
        %vm918 = vcmask 191616
        %919 = vst.msk [vmem:[#allocation3] sm:$0xf] %vm918, %v916
        %920 = vrot.lane.b32.xlu0 %v561, 104
        %v921 = vpop.permute.xlu0 %920
        %922 = vrot.lane.b32.xlu0 %v561, 72
        %v923 = vpop.permute.xlu0 %922
        %v925 = vsel %vm565, %v921, 0
        %v928 = vsel %vm565, %v923, 0
        %930 = vmatprep.subr.bf16.mxu0 0
        %931 = vmatpush1.bf16.xpose.msra.mxu0 0
        %932 = vmatprep.subr.bf16.mxu0 0
        %933 = vmatpush1.bf16.xpose.msra.mxu0 0
        %934 = vmatprep.subr.bf16.mxu0 0
        %935 = vmatpush1.bf16.xpose.msra.mxu0 0
        %936 = vmatprep.subr.bf16.mxu0 0
        %937 = vmatpush1.bf16.xpose.msra.mxu0 0
        %938 = vmatprep.subr.bf16.mxu0 0
        %939 = vmatpush1.bf16.xpose.msra.mxu0 0
        %940 = vmatprep.subr.bf16.mxu0 0
        %941 = vmatpush1.bf16.xpose.msra.mxu0 0
        %942 = vmatprep.subr.bf16.mxu0 0
        %943 = vmatpush1.bf16.xpose.msra.mxu0 0
        %944 = vmatprep.subr.bf16.mxu0 0
        %945 = vmatpush1.bf16.xpose.msra.mxu0 %v928
        %946 = vmatprep.subr.bf16.mxu0 0
        %947 = vmatpush2.bf16.xpose.msra.mxu0 0
        %948 = vmatprep.subr.bf16.mxu0 0
        %949 = vmatpush2.bf16.xpose.msra.mxu0 0
        %950 = vmatprep.subr.bf16.mxu0 0
        %951 = vmatpush2.bf16.xpose.msra.mxu0 0
        %952 = vmatprep.subr.bf16.mxu0 0
        %953 = vmatpush2.bf16.xpose.msra.mxu0 0
        %954 = vmatprep.subr.bf16.mxu0 0
        %955 = vmatpush2.bf16.xpose.msra.mxu0 0
        %956 = vmatprep.subr.bf16.mxu0 0
        %957 = vmatpush2.bf16.xpose.msra.mxu0 0
        %958 = vmatprep.subr.bf16.mxu0 0
        %959 = vmatpush2.bf16.xpose.msra.mxu0 0
        %960 = vmatprep.subr.bf16.mxu0 0
        %961 = vmatpush2.bf16.xpose.msra.mxu0 0
        %962 = vmatprep.mubr.bf16.mxu0 0
        %963 = vmatmul.mubr.bf16.gmra.mxu0 %v925
        %v964 = vpop.f32.mrf.mxu0
        %v965 = vadd.f32 0.0, %v964
        %v966 = vpop.f32.mrf.mxu0
        %v967 = vpop.f32.mrf.mxu0
        %v968 = vpop.f32.mrf.mxu0
        %969 = vdwg.mxu0
        %v970 = vmul.f32 %v965, 0.35355338
        %v971 = vsel %vm560, %v970, -1000000.0
        %v972 = vsel %vm565, %v971, -inf
        %973 = vmax.xlane.f32.xlu0 %v972
        %v974 = vpop.xlane.xlu0 %973
        %v975 = vsub.f32 %v971, %v974
        %v976 = vmul.f32 %v975, 1.442695
        %v977 = vpow.pop %v976
        %v978 = vsel %vm565, %v977, 0.0
        %979 = vadd.xlane.f32.xlu0 %v978
        %v980 = vpop.xlane.xlu0 %979
        %v981 = vrcp.pop %v980
        %v982 = vmul.f32 %v977, %v981
        %v983 = vpack.c.bf16 %v982, %v982
        %984 = vrot.lane.b32.xlu0 %v561, 40
        %v985 = vpop.permute.xlu0 %984
        %v987 = vsel %vm565, %v983, 0
        %v990 = vsel %vm631, %v985, 0
        %992 = vmatprep.subr.bf16.mxu0 0
        %993 = vmatpush1.bf16.msra.mxu0 0
        %994 = vmatprep.subr.bf16.mxu0 0
        %995 = vmatpush1.bf16.msra.mxu0 0
        %996 = vmatprep.subr.bf16.mxu0 0
        %997 = vmatpush1.bf16.msra.mxu0 0
        %998 = vmatprep.subr.bf16.mxu0 0
        %999 = vmatpush1.bf16.msra.mxu0 0
        %1000 = vmatprep.subr.bf16.mxu0 0
        %1001 = vmatpush1.bf16.msra.mxu0 0
        %1002 = vmatprep.subr.bf16.mxu0 0
        %1003 = vmatpush1.bf16.msra.mxu0 0
        %1004 = vmatprep.subr.bf16.mxu0 0
        %1005 = vmatpush1.bf16.msra.mxu0 0
        %1006 = vmatprep.subr.bf16.mxu0 0
        %1007 = vmatpush1.bf16.msra.mxu0 %v990
        %1008 = vmatprep.subr.bf16.mxu0 0
        %1009 = vmatpush2.bf16.msra.mxu0 0
        %1010 = vmatprep.subr.bf16.mxu0 0
        %1011 = vmatpush2.bf16.msra.mxu0 0
        %1012 = vmatprep.subr.bf16.mxu0 0
        %1013 = vmatpush2.bf16.msra.mxu0 0
        %1014 = vmatprep.subr.bf16.mxu0 0
        %1015 = vmatpush2.bf16.msra.mxu0 0
        %1016 = vmatprep.subr.bf16.mxu0 0
        %1017 = vmatpush2.bf16.msra.mxu0 0
        %1018 = vmatprep.subr.bf16.mxu0 0
        %1019 = vmatpush2.bf16.msra.mxu0 0
        %1020 = vmatprep.subr.bf16.mxu0 0
        %1021 = vmatpush2.bf16.msra.mxu0 0
        %1022 = vmatprep.subr.bf16.mxu0 0
        %1023 = vmatpush2.bf16.msra.mxu0 0
        %1024 = vmatprep.mubr.bf16.mxu0 0
        %1025 = vmatmul.mubr.bf16.gmra.mxu0 %v987
        %v1026 = vpop.f32.mrf.mxu0
        %v1027 = vadd.f32 0.0, %v1026
        %v1028 = vpop.f32.mrf.mxu0
        %v1029 = vpop.f32.mrf.mxu0
        %v1030 = vpop.f32.mrf.mxu0
        %1031 = vdwg.mxu0
        %v1032 = vpack.c.bf16 %v1027, %v1027
        %v1034 = vunpack.c.l.b16 %v1032
        %v1035 = vpack.c.b16 %v1034, %v1034
        %1036 = vrot.lane.b32.xlu0 %v1035, 24
        %v1037 = vpop.permute.xlu0 %1036
        %vm1039 = vcmask 257216
        %1040 = vst.msk [vmem:[#allocation3] sm:$0xf] %vm1039, %v1037
        %v1041 = vld [vmem:[#allocation3] sm:$0xf]
        %v1042 = vld [vmem:[%s457] sm:$0xf]
        %v1043 = vld [vmem:[%s457 + $0x4] sm:$0xf]
        %v1044 = vld [vmem:[%s457 + $0x8] sm:$0xf]
        %v1045 = vld [vmem:[%s457 + $0xc] sm:$0xf]
        %v1050 = vunpack.c.l.b16 %v1042
        %v1051 = vunpack.c.l.b16 %v1043
        %v1052 = vunpack.c.l.b16 %v1044
        %v1053 = vunpack.c.l.b16 %v1045
        %v1054 = vpack.c.b16 %v1051, %v1050
        %v1055 = vpack.c.b16 %v1053, %v1052
        %v1059 = vsel %vm512, %v1041, 0
        %1061 = vmatprep.subr.bf16.mxu0 0
        %1062 = vmatpush1.bf16.msra.mxu0 0
        %1063 = vmatprep.subr.bf16.mxu0 0
        %1064 = vmatpush1.bf16.msra.mxu0 0
        %1065 = vmatprep.subr.bf16.mxu0 0
        %1066 = vmatpush1.bf16.msra.mxu0 0
        %1067 = vmatprep.subr.bf16.mxu0 0
        %1068 = vmatpush1.bf16.msra.mxu0 0
        %1069 = vmatprep.subr.bf16.mxu0 0
        %1070 = vmatpush1.bf16.msra.mxu0 0
        %1071 = vmatprep.subr.bf16.mxu0 0
        %1072 = vmatpush1.bf16.msra.mxu0 0
        %1073 = vmatprep.subr.bf16.mxu0 0
        %1074 = vmatpush1.bf16.msra.mxu0 %v1055
        %1075 = vmatprep.subr.bf16.mxu0 0
        %1076 = vmatpush1.bf16.msra.mxu0 %v1054
        %1077 = vmatprep.subr.bf16.mxu0 0
        %1078 = vmatpush2.bf16.msra.mxu0 0
        %1079 = vmatprep.subr.bf16.mxu0 0
        %1080 = vmatpush2.bf16.msra.mxu0 0
        %1081 = vmatprep.subr.bf16.mxu0 0
        %1082 = vmatpush2.bf16.msra.mxu0 0
        %1083 = vmatprep.subr.bf16.mxu0 0
        %1084 = vmatpush2.bf16.msra.mxu0 0
        %1085 = vmatprep.subr.bf16.mxu0 0
        %1086 = vmatpush2.bf16.msra.mxu0 0
        %1087 = vmatprep.subr.bf16.mxu0 0
        %1088 = vmatpush2.bf16.msra.mxu0 0
        %1089 = vmatprep.subr.bf16.mxu0 0
        %1090 = vmatpush2.bf16.msra.mxu0 0
        %1091 = vmatprep.subr.bf16.mxu0 0
        %1092 = vmatpush2.bf16.msra.mxu0 0
        %1093 = vmatprep.mubr.bf16.mxu0 0
        %1094 = vmatmul.mubr.bf16.gmra.mxu0 %v1059
        %v1095 = vpop.f32.mrf.mxu0
        %v1096 = vadd.f32 0.0, %v1095
        %v1097 = vpop.f32.mrf.mxu0
        %v1098 = vpop.f32.mrf.mxu0
        %v1099 = vpop.f32.mrf.mxu0
        %1100 = vdwg.mxu0
        %1101 = vst.msk [vmem:[#allocation2] sm:$0xff] %vm512, %v1096
        %v1102 = vld [vmem:[#allocation2] sm:$0xff]
        %v1103 = vld [vmem:[%s474] sm:$0x1]
        %v1104 = vlaneseq
        %v1105 = vshrl.u32 %v1104, 7
        %v1106 = vsub.s32 0, %v1105
        %v1107 = vrot.slane %v1103, %v1106
        %v1108 = vadd.f32 %v1102, %v1107
        %v1109 = vadd.f32 %v487, %v1108
        %v1110 = vld [vmem:[%s474 + $0x1] sm:$0x1]
        %v1111 = vld [vmem:[%s474 + $0x2] sm:$0x1]
        %v1112 = vsel %vm512, %v1109, 0.0
        %1113 = vadd.xlane.f32.xlu0 %v1112
        %v1114 = vpop.xlane.xlu0 %1113
        %v1115 = vrcp.pop 32.0
        %v1116 = vmul.f32 %v1114, %v1115
        %v1117 = vsub.f32 %v1109, %v1116
        %v1118 = vmul.f32 %v1117, %v1117
        %v1119 = vsel %vm512, %v1118, 0.0
        %1120 = vadd.xlane.f32.xlu0 %v1119
        %v1121 = vpop.xlane.xlu0 %1120
        %v1122 = vmul.f32 %v1121, %v1115
        %v1123 = vadd.f32 %v1122, 1e-05
        %v1124 = vrsqrt.pop %v1123
        %v1125 = vmul.f32 %v1117, %v1124
        %v1126 = vlaneseq
        %v1127 = vshrl.u32 %v1126, 7
        %v1128 = vsub.s32 0, %v1127
        %v1129 = vrot.slane %v1110, %v1128
        %v1130 = vmul.f32 %v1125, %v1129
        %v1131 = vlaneseq
        %v1132 = vshrl.u32 %v1131, 7
        %v1133 = vsub.s32 0, %v1132
        %v1134 = vrot.slane %v1111, %v1133
        %v1135 = vadd.f32 %v1130, %v1134
        %v1136 = vpack.c.bf16 %v1135, %v1135
        %v1137 = vld [vmem:[%s462] sm:$0xf]
        %v1138 = vld [vmem:[%s462 + $0x4] sm:$0xf]
        %v1139 = vld [vmem:[%s462 + $0x8] sm:$0xf]
        %v1140 = vld [vmem:[%s462 + $0xc] sm:$0xf]
        %v1141 = vld [vmem:[%s465] sm:$0x1]
        %v1143 = vlaneseq
        %v1144 = vshrl.u32 %v1143, 7
        %v1145 = vsub.s32 0, %v1144
        %v1146 = vrot.slane %v1141, %v1145
        %v1152 = vunpack.c.l.b16 %v1137
        %v1153 = vunpack.c.l.b16 %v1138
        %v1154 = vunpack.c.l.b16 %v1139
        %v1155 = vunpack.c.l.b16 %v1140
        %v1156 = vpack.c.b16 %v1153, %v1152
        %v1157 = vpack.c.b16 %v1155, %v1154
        %v1161 = vsel %vm512, %v1136, 0
        %1163 = vmatprep.subr.bf16.mxu0 0
        %1164 = vmatpush1.bf16.msra.mxu0 0
        %1165 = vmatprep.subr.bf16.mxu0 0
        %1166 = vmatpush1.bf16.msra.mxu0 0
        %1167 = vmatprep.subr.bf16.mxu0 0
        %1168 = vmatpush1.bf16.msra.mxu0 0
        %1169 = vmatprep.subr.bf16.mxu0 0
        %1170 = vmatpush1.bf16.msra.mxu0 0
        %1171 = vmatprep.subr.bf16.mxu0 0
        %1172 = vmatpush1.bf16.msra.mxu0 0
        %1173 = vmatprep.subr.bf16.mxu0 0
        %1174 = vmatpush1.bf16.msra.mxu0 0
        %1175 = vmatprep.subr.bf16.mxu0 0
        %1176 = vmatpush1.bf16.msra.mxu0 %v1157
        %1177 = vmatprep.subr.bf16.mxu0 0
        %1178 = vmatpush1.bf16.msra.mxu0 %v1156
        %1179 = vmatprep.subr.bf16.mxu0 0
        %1180 = vmatpush2.bf16.msra.mxu0 0
        %1181 = vmatprep.subr.bf16.mxu0 0
        %1182 = vmatpush2.bf16.msra.mxu0 0
        %1183 = vmatprep.subr.bf16.mxu0 0
        %1184 = vmatpush2.bf16.msra.mxu0 0
        %1185 = vmatprep.subr.bf16.mxu0 0
        %1186 = vmatpush2.bf16.msra.mxu0 0
        %1187 = vmatprep.subr.bf16.mxu0 0
        %1188 = vmatpush2.bf16.msra.mxu0 0
        %1189 = vmatprep.subr.bf16.mxu0 0
        %1190 = vmatpush2.bf16.msra.mxu0 0
        %1191 = vmatprep.subr.bf16.mxu0 0
        %1192 = vmatpush2.bf16.msra.mxu0 0
        %1193 = vmatprep.subr.bf16.mxu0 0
        %1194 = vmatpush2.bf16.msra.mxu0 0
        %1195 = vmatprep.mubr.bf16.mxu0 0
        %1196 = vmatmul.mubr.bf16.gmra.mxu0 %v1161
        %v1197 = vpop.f32.mrf.mxu0
        %v1198 = vadd.f32 %v1146, %v1197
        %v1199 = vpop.f32.mrf.mxu0
        %v1200 = vpop.f32.mrf.mxu0
        %v1201 = vpop.f32.mrf.mxu0
        %1202 = vdwg.mxu0
        %v1203 = vmax.f32 %v1198, 0.0
        %v1204 = vpack.c.bf16 %v1203, %v1203
        %v1205 = vld [vmem:[%s470] sm:$0xf]
        %v1206 = vld [vmem:[%s470 + $0x4] sm:$0xf]
        %v1207 = vld [vmem:[%s470 + $0x8] sm:$0xf]
        %v1208 = vld [vmem:[%s470 + $0xc] sm:$0xf]
        %v1209 = vld [vmem:[%s470 + $0x10] sm:$0xf]
        %v1210 = vld [vmem:[%s470 + $0x14] sm:$0xf]
        %v1211 = vld [vmem:[%s470 + $0x18] sm:$0xf]
        %v1212 = vld [vmem:[%s470 + $0x1c] sm:$0xf]
        %v1213 = vld [vmem:[%s474 + $0x3] sm:$0x1]
        %v1214 = vlaneseq
        %v1215 = vshrl.u32 %v1214, 7
        %v1216 = vsub.s32 0, %v1215
        %v1217 = vrot.slane %v1213, %v1216
        %v1226 = vunpack.c.l.b16 %v1205
        %v1227 = vunpack.c.l.b16 %v1206
        %v1228 = vunpack.c.l.b16 %v1207
        %v1229 = vunpack.c.l.b16 %v1208
        %v1230 = vunpack.c.l.b16 %v1209
        %v1231 = vunpack.c.l.b16 %v1210
        %v1232 = vunpack.c.l.b16 %v1211
        %v1233 = vunpack.c.l.b16 %v1212
        %v1234 = vpack.c.b16 %v1227, %v1226
        %v1235 = vpack.c.b16 %v1229, %v1228
        %v1236 = vpack.c.b16 %v1231, %v1230
        %v1237 = vpack.c.b16 %v1233, %v1232
        %vm1242 = vcmask 523264
        %v1244 = vsel %vm1242, %v1204, 0
        %1246 = vmatprep.subr.bf16.mxu0 0
        %1247 = vmatpush1.bf16.msra.mxu0 0
        %1248 = vmatprep.subr.bf16.mxu0 0
        %1249 = vmatpush1.bf16.msra.mxu0 0
        %1250 = vmatprep.subr.bf16.mxu0 0
        %1251 = vmatpush1.bf16.msra.mxu0 0
        %1252 = vmatprep.subr.bf16.mxu0 0
        %1253 = vmatpush1.bf16.msra.mxu0 0
        %1254 = vmatprep.subr.bf16.mxu0 0
        %1255 = vmatpush1.bf16.msra.mxu0 %v1237
        %1256 = vmatprep.subr.bf16.mxu0 0
        %1257 = vmatpush1.bf16.msra.mxu0 %v1236
        %1258 = vmatprep.subr.bf16.mxu0 0
        %1259 = vmatpush1.bf16.msra.mxu0 %v1235
        %1260 = vmatprep.subr.bf16.mxu0 0
        %1261 = vmatpush1.bf16.msra.mxu0 %v1234
        %1262 = vmatprep.subr.bf16.mxu0 0
        %1263 = vmatpush2.bf16.msra.mxu0 0
        %1264 = vmatprep.subr.bf16.mxu0 0
        %1265 = vmatpush2.bf16.msra.mxu0 0
        %1266 = vmatprep.subr.bf16.mxu0 0
        %1267 = vmatpush2.bf16.msra.mxu0 0
        %1268 = vmatprep.subr.bf16.mxu0 0
        %1269 = vmatpush2.bf16.msra.mxu0 0
        %1270 = vmatprep.subr.bf16.mxu0 0
        %1271 = vmatpush2.bf16.msra.mxu0 0
        %1272 = vmatprep.subr.bf16.mxu0 0
        %1273 = vmatpush2.bf16.msra.mxu0 0
        %1274 = vmatprep.subr.bf16.mxu0 0
        %1275 = vmatpush2.bf16.msra.mxu0 0
        %1276 = vmatprep.subr.bf16.mxu0 0
        %1277 = vmatpush2.bf16.msra.mxu0 0
        %1278 = vmatprep.mubr.bf16.mxu0 0
        %1279 = vmatmul.mubr.bf16.gmra.mxu0 %v1244
        %v1280 = vpop.f32.mrf.mxu0
        %v1281 = vadd.f32 %v1217, %v1280
        %v1282 = vpop.f32.mrf.mxu0
        %v1283 = vpop.f32.mrf.mxu0
        %v1284 = vpop.f32.mrf.mxu0
        %1285 = vdwg.mxu0
        %v1286 = vadd.f32 %v1135, %v1281
        %v1287 = vld [vmem:[%s474 + $0x4] sm:$0x1]
        %v1288 = vld [vmem:[%s474 + $0x5] sm:$0x1]
        %v1289 = vsel %vm512, %v1286, 0.0
        %1290 = vadd.xlane.f32.xlu0 %v1289
        %v1291 = vpop.xlane.xlu0 %1290
        %v1292 = vmul.f32 %v1291, %v1115
        %v1293 = vsub.f32 %v1286, %v1292
        %v1294 = vmul.f32 %v1293, %v1293
        %v1295 = vsel %vm512, %v1294, 0.0
        %1296 = vadd.xlane.f32.xlu0 %v1295
        %v1297 = vpop.xlane.xlu0 %1296
        %v1298 = vmul.f32 %v1297, %v1115
        %v1299 = vadd.f32 %v1298, 1e-05
        %v1300 = vrsqrt.pop %v1299
        %v1301 = vmul.f32 %v1293, %v1300
        %v1302 = vlaneseq
        %v1303 = vshrl.u32 %v1302, 7
        %v1304 = vsub.s32 0, %v1303
        %v1305 = vrot.slane %v1287, %v1304
        %v1306 = vmul.f32 %v1301, %v1305
        %v1307 = vlaneseq
        %v1308 = vshrl.u32 %v1307, 7
        %v1309 = vsub.s32 0, %v1308
        %v1310 = vrot.slane %v1288, %v1309
        %v1311 = vadd.f32 %v1306, %v1310
        %1312 = vst.msk [vmem:[%s478] sm:$0xff] %vm512, %v1311
        %p1313 = scmp.lt.s32.totalorder %s25, 1
        %s1314 = scalar_select %p1313, %s25, 1
        %s1315 = smul.addr %s1314, 8
        %s1316 = scalar_lea.vmem %s9, %s1315
        // Predicated region
        $region65: #{bert_encoder_forward.1} parent=55 // pred_check
          %p1317 = pneg %p280
        $region66: #{bert_encoder_forward.1} parent=55 // pred_check_branch
          %1319 = sbr.rel (%p1317) target = $region68
        $region67: #{bert_encoder_forward.1} parent=55 // pred_region
          _
        $region68: #{bert_encoder_forward.1} parent=55 // pred_fallthru
          _
      $region56: #{bert_encoder_forward.1} parent=5 // pred_fallthru
        _
      %p1320 = scmp.le.s32.totalorder 2, %s16
      // Predicated region
      $region69: #{bert_encoder_forward.1} parent=5 // pred_check
        %p1321 = pneg %p1320
      $region70: #{bert_encoder_forward.1} parent=5 // pred_check_branch
        %1323 = sbr.rel (%p1321) target = $region72
      $region71: #{bert_encoder_forward.1} parent=5 // pred_region
        %s1324 = ssub.s32 %s16, 2
        // Predicated region
        $region73: #{bert_encoder_forward.1} parent=71 // pred_check
          %p1325 = pneg %p286
        $region74: #{bert_encoder_forward.1} parent=71 // pred_check_branch
          %1327 = sbr.rel (%p1325) target = $region76
        $region75: #{bert_encoder_forward.1} parent=71 // pred_region
          %p1328 = scmp.lt.s32.totalorder %s27, 1
          %s1329 = scalar_select %p1328, %s27, 1
          %s1330 = smul.addr %s1329, 8
          %s1331 = scalar_lea.vmem %s9, %s1330
        $region76: #{bert_encoder_forward.1} parent=71 // pred_fallthru
          _
      $region72: #{bert_encoder_forward.1} parent=5 // pred_fallthru
        _
    $region6: #{bert_encoder_forward.1} parent=1 // loop_footer
      %s20 = sadd.s32 1, %s16
    $region7: #{bert_encoder_forward.1} parent=1 // loop_footer_branch
      %15 = sbr.rel target = $region3
    $region8: #{bert_encoder_forward.1} parent=1 // loop_exit
      _
    %1332 = vsyncpa [#allocation5], 1
    %s1333 = scalar_lea.sflag [#allocation5], 1
    %1334 = vsyncpa %s1333, 1

</llo_original>
